<compile_context>
chip_gen: v7x
topology: tpu7x:2x2x1
jax: 0.10.0
libtpu: 0.0.40
codegen_flags: <defaults>
</compile_context>

<pallas_src>
import jax
import jax.numpy as jnp
from jax import lax
from jax.experimental import pallas as pl
from jax.experimental.pallas import tpu as pltpu


# ---------------- Pallas kernels ----------------

def conv_bn_relu_kernel(p_ref, w_ref, shift_ref, o_ref):
    # p_ref:     [TM, K]    bf16 im2col patch rows for this grid step
    # w_ref:     [K, Cout]  bf16 conv weights with BN scale folded in
    # shift_ref: [1, Cout]  f32  beta - running_mean * scale
    # o_ref:     [TM, Cout] f32
    acc = jnp.dot(p_ref[...], w_ref[...], preferred_element_type=jnp.float32)
    o_ref[...] = jnp.maximum(acc + shift_ref[...], 0.0).astype(o_ref.dtype)


def maxpool3x3s2_kernel(a_ref, b_ref, o_ref, cmax_ref):
    # Separable 3x3 / stride-2 / pad-1 max pool for one batch element.
    # a_ref:    [1, OHp, PW+1, C]  even padded columns (2q)
    # b_ref:    [1, OHp, PW,   C]  odd  padded columns (2q+1)
    # o_ref:    [1, PH,  PW,   C]
    # cmax_ref: [2*PH+1, PW, C]    scratch: per conv-row max over 3 column taps
    _, ph, pw, _ = o_ref.shape
    # Column pass: cmax[h, q] = max over padded cols {2q, 2q+1, 2q+2} of row h.
    for h in range(2 * ph + 1):                 # static unroll (PH known)
        a0 = a_ref[0, h, pl.ds(0, pw), :]       # col 2q
        a1 = a_ref[0, h, pl.ds(1, pw), :]       # col 2q+2
        b0 = b_ref[0, h]                        # col 2q+1
        cmax_ref[h] = jnp.maximum(jnp.maximum(a0, a1), b0)
    # Row pass: out[p, q] = max over padded rows {2p, 2p+1, 2p+2}.
    for p in range(ph):
        o_ref[0, p] = jnp.maximum(
            jnp.maximum(cmax_ref[2 * p], cmax_ref[2 * p + 1]),
            cmax_ref[2 * p + 2])


# ---------------- wrapper (glue: layout, im2col, padding) ----------------

def _pick_tile_m(m):
    # Largest multiple-of-8 divisor of M, capped at 2048: 2048 rows of
    # bf16[.,147] + f32[.,64] double-buffered is ~2.3 MiB, safely inside the
    # scoped-VMEM budget on v5e/v6e (128 MiB) and v7x (64 MiB).
    for t in (2048, 1024, 512, 256, 128, 64, 32, 16, 8):
        if m % t == 0:
            return t
    return m


def res_bottom_forward(x_nchw, w_hwio, gamma, beta, run_mean, run_var,
                       eps=1e-5, tile_m=None):
    N, Cin, H, W = x_nchw.shape
    KH, KW, _, Cout = w_hwio.shape
    stride, pad = 2, 3
    OH = (H + 2 * pad - KH) // stride + 1
    OW = (W + 2 * pad - KW) // stride + 1
    K = KH * KW * Cin
    M = N * OH * OW

    # ---- eval-mode BN folded into the conv weights (glue, f32) ----
    inv_std = 1.0 / jnp.sqrt(run_var + eps)
    scale = gamma * inv_std                                            # [Cout]
    shift = (beta - run_mean * scale).reshape(1, Cout).astype(jnp.float32)
    w2d = (w_hwio.reshape(K, Cout) * scale).astype(jnp.bfloat16)       # folded

    # ---- im2col (glue; bf16 halves the dominant HBM traffic term) ----
    x = jnp.transpose(x_nchw, (0, 2, 3, 1)).astype(jnp.bfloat16)       # NHWC
    xp = jnp.pad(x, ((0, 0), (pad, pad), (pad, pad), (0, 0)))
    taps = []
    for di in range(KH):
        for dj in range(KW):
            taps.append(
                xp[:, di:di + stride * OH:stride, dj:dj + stride * OW:stride, :])
    patches = jnp.concatenate(taps, axis=-1).reshape(M, K)             # bf16

    # ---- conv + BN + ReLU (Pallas, MXU matmul tiled over M) ----
    if tile_m is None or tile_m <= 0 or M % tile_m != 0 or tile_m % 8 != 0:
        tile_m = _pick_tile_m(M)
    grid_m = M // tile_m
    conv_out = pl.pallas_call(
        conv_bn_relu_kernel,
        out_shape=jax.ShapeDtypeStruct((M, Cout), jnp.float32),
        grid=(grid_m,),
        in_specs=[
            pl.BlockSpec((tile_m, K), lambda i: (i, 0)),
            pl.BlockSpec((K, Cout), lambda i: (0, 0)),
            pl.BlockSpec((1, Cout), lambda i: (0, 0)),
        ],
        out_specs=pl.BlockSpec((tile_m, Cout), lambda i: (i, 0)),
        compiler_params=pltpu.CompilerParams(
            dimension_semantics=("parallel",),
            vmem_limit_bytes=32 * 1024 * 1024,
            allow_input_fusion=[True, False, False],  # allow im2col fusion
        ),
    )(patches, w2d, shift)

    # ---- MaxPool 3x3 / stride 2 / pad 1 (Pallas, separable, no 9x taps) ----
    y = conv_out.reshape(N, OH, OW, Cout)
    PH = (OH + 2 - 3) // 2 + 1
    PW = (OW + 2 - 3) // 2 + 1
    OHp = OH + 2
    neg = jnp.finfo(jnp.float32).min
    yp = jnp.pad(y, ((0, 0), (1, 1), (1, 1), (0, 0)), constant_values=neg)
    ya = yp[:, :, 0:2 * PW + 1:2, :]          # [N, OHp, PW+1, C]  cols 2q
    yb = yp[:, :, 1:2 * PW:2, :]              # [N, OHp, PW,   C]  cols 2q+1

    pooled = pl.pallas_call(
        maxpool3x3s2_kernel,
        out_shape=jax.ShapeDtypeStruct((N, PH, PW, Cout), jnp.float32),
        grid=(N,),
        in_specs=[
            pl.BlockSpec((1, OHp, PW + 1, Cout), lambda n: (n, 0, 0, 0)),
            pl.BlockSpec((1, OHp, PW, Cout), lambda n: (n, 0, 0, 0)),
        ],
        out_specs=pl.BlockSpec((1, PH, PW, Cout), lambda n: (n, 0, 0, 0)),
        scratch_shapes=[pltpu.VMEM((2 * PH + 1, PW, Cout), jnp.float32)],
        compiler_params=pltpu.CompilerParams(
            dimension_semantics=("parallel",),
            vmem_limit_bytes=32 * 1024 * 1024,
        ),
    )(ya, yb)

    return jnp.transpose(pooled, (0, 3, 1, 2))                  # back to NCHW


# ---------------- pure-JAX reference for verification ----------------

def reference(x_nchw, w_hwio, gamma, beta, run_mean, run_var, eps=1e-5):
    # Uses the same bf16 quantization of the matmul operands as the kernel, so
    # the comparison isolates kernel correctness rather than bf16 rounding.
    scale = gamma / jnp.sqrt(run_var + eps)
    x = jnp.transpose(x_nchw, (0, 2, 3, 1)).astype(jnp.bfloat16).astype(jnp.float32)
    w_s = (w_hwio * scale).astype(jnp.bfloat16).astype(jnp.float32)
    conv = lax.conv_general_dilated(
        x, w_s, window_strides=(2, 2), padding=[(3, 3), (3, 3)],
        dimension_numbers=("NHWC", "HWIO", "NHWC"))
    y = jnp.maximum(conv + (beta - run_mean * scale), 0.0)
    neg = jnp.finfo(jnp.float32).min
    p = lax.reduce_window(y, neg, lax.max, (1, 3, 3, 1), (1, 2, 2, 1),
                          padding=((0, 0), (1, 1), (1, 1), (0, 0)))
    return jnp.transpose(p, (0, 3, 1, 2))


if __name__ == "__main__":
    key = jax.random.PRNGKey(0)
    k_x, k_w, k_g, k_b, k_m, k_v = jax.random.split(key, 6)

    N, Cin, H, W = 2, 3, 32, 32
    Cout, KH, KW = 64, 7, 7

    x = jax.random.normal(k_x, (N, Cin, H, W), jnp.float32)              # NCHW
    w = jax.random.normal(k_w, (KH, KW, Cin, Cout), jnp.float32) * 0.05  # HWIO
    gamma = 1.0 + 0.1 * jax.random.normal(k_g, (Cout,), jnp.float32)
    beta = 0.1 * jax.random.normal(k_b, (Cout,), jnp.float32)
    run_mean = 0.1 * jax.random.normal(k_m, (Cout,), jnp.float32)
    run_var = jnp.abs(jax.random.normal(k_v, (Cout,), jnp.float32)) + 0.5

    # tile_m=128 gives a 4-step conv grid at this toy size (exercises the
    # pipeline / index maps); tile_m=None auto-picks a large tile for real shapes.
    fwd = jax.jit(lambda *a: res_bottom_forward(*a, tile_m=128))
    out = jax.block_until_ready(fwd(x, w, gamma, beta, run_mean, run_var))

    ref = jax.block_until_ready(reference(x, w, gamma, beta, run_mean, run_var))
    assert out.shape == (N, Cout, 8, 8), out.shape
    max_err = float(jnp.max(jnp.abs(out - ref)))
    assert jnp.allclose(out, ref, atol=1e-2, rtol=1e-2), max_err

    print("KERNEL_OK")
</pallas_src>

<mosaic_0001>
module attributes {stable_mosaic.version = 11 : i64} {
  func.func @conv_bn_relu_kernel(%arg0: i32, %arg1: memref<128x147xbf16, #tpu.memory_space<vmem>>, %arg2: memref<147x64xbf16, #tpu.memory_space<vmem>>, %arg3: memref<1x64xf32, #tpu.memory_space<vmem>>, %arg4: memref<128x64xf32, #tpu.memory_space<vmem>>) attributes {dimension_semantics = [#tpu.dimension_semantics<parallel>], iteration_bounds = array<i64: 4>, scalar_prefetch = 0 : i64, scratch_operands = 0 : i64, tpu.core_type = #tpu.core_type<tc>, window_params = [{transform_indices = @transform_0, window_bounds = array<i64: 128, 147>}, {pipeline_mode = #tpu.pipeline_mode<synchronous>, transform_indices = @transform_1, window_bounds = array<i64: 147, 64>}, {pipeline_mode = #tpu.pipeline_mode<synchronous>, transform_indices = @transform_2, window_bounds = array<i64: 1, 64>}, {transform_indices = @transform_3, window_bounds = array<i64: 128, 64>}]} {
    %c0 = arith.constant 0 : index
    %c0_0 = arith.constant 0 : index
    %0 = vector.load %arg1[%c0, %c0_0] : memref<128x147xbf16, #tpu.memory_space<vmem>>, vector<128x147xbf16>
    %c0_1 = arith.constant 0 : index
    %c0_2 = arith.constant 0 : index
    %1 = vector.load %arg2[%c0_1, %c0_2] : memref<147x64xbf16, #tpu.memory_space<vmem>>, vector<147x64xbf16>
    %cst = arith.constant dense<0.000000e+00> : vector<128x64xf32>
    %2 = tpu.matmul %0, %1, %cst {dimension_numbers = #tpu.dot_dimension_numbers<[1], [0], [0], [1], [0, 0, 1, 1], [], []>} : vector<128x147xbf16>, vector<147x64xbf16>, vector<128x64xf32> -> vector<128x64xf32>
    %c0_3 = arith.constant 0 : index
    %c0_4 = arith.constant 0 : index
    %3 = vector.load %arg3[%c0_3, %c0_4] : memref<1x64xf32, #tpu.memory_space<vmem>>, vector<1x64xf32>
    %4 = vector.broadcast %3 : vector<1x64xf32> to vector<128x64xf32>
    %5 = arith.addf %2, %4 : vector<128x64xf32>
    %cst_5 = arith.constant 0.000000e+00 : f32
    %6 = vector.broadcast %cst_5 : f32 to vector<128x64xf32>
    %7 = arith.maximumf %5, %6 : vector<128x64xf32>
    %c0_6 = arith.constant 0 : index
    %c0_7 = arith.constant 0 : index
    %8 = vector.load %arg4[%c0_6, %c0_7] : memref<128x64xf32, #tpu.memory_space<vmem>>, vector<128x64xf32>
    tpu.vector_store %arg4[%c0_6, %c0_7], %7 {strides = array<i32>} : memref<128x64xf32, #tpu.memory_space<vmem>>, vector<128x64xf32>,
    return
  }
  func.func @transform_0(%arg0: i32) -> (i32, i32) {
    %c0_i32 = arith.constant 0 : i32
    %c0_i32_0 = arith.constant 0 : i32
    return %arg0, %c0_i32 : i32, i32
  }
  func.func @transform_1(%arg0: i32) -> (i32, i32) {
    %c0_i32 = arith.constant 0 : i32
    %c0_i32_0 = arith.constant 0 : i32
    %c0_i32_1 = arith.constant 0 : i32
    return %c0_i32, %c0_i32_0 : i32, i32
  }
  func.func @transform_2(%arg0: i32) -> (i32, i32) {
    %c0_i32 = arith.constant 0 : i32
    %c0_i32_0 = arith.constant 0 : i32
    %c0_i32_1 = arith.constant 0 : i32
    return %c0_i32, %c0_i32_0 : i32, i32
  }
  func.func @transform_3(%arg0: i32) -> (i32, i32) {
    %c0_i32 = arith.constant 0 : i32
    %c0_i32_0 = arith.constant 0 : i32
    return %arg0, %c0_i32 : i32, i32
  }
}

module attributes {stable_mosaic.version = 11 : i64} {
  func.func @maxpool3x3s2_kernel(%arg0: i32, %arg1: memref<1x18x9x64xf32, #tpu.memory_space<vmem>>, %arg2: memref<1x18x8x64xf32, #tpu.memory_space<vmem>>, %arg3: memref<1x8x8x64xf32, #tpu.memory_space<vmem>>, %arg4: memref<17x8x64xf32, #tpu.memory_space<vmem>>) attributes {dimension_semantics = [#tpu.dimension_semantics<parallel>], iteration_bounds = array<i64: 2>, scalar_prefetch = 0 : i64, scratch_operands = 1 : i64, tpu.core_type = #tpu.core_type<tc>, window_params = [{transform_indices = @transform_0, window_bounds = array<i64: 1, 18, 9, 64>}, {transform_indices = @transform_1, window_bounds = array<i64: 1, 18, 8, 64>}, {transform_indices = @transform_2, window_bounds = array<i64: 1, 8, 8, 64>}]} {
    %c0 = arith.constant 0 : index
    %c0_0 = arith.constant 0 : index
    %c0_1 = arith.constant 0 : index
    %c0_2 = arith.constant 0 : index
    %0 = vector.load %arg1[%c0, %c0_0, %c0_1, %c0_2] : memref<1x18x9x64xf32, #tpu.memory_space<vmem>>, vector<1x1x8x64xf32>
    %1 = vector.shape_cast %0 : vector<1x1x8x64xf32> to vector<8x64xf32>
    %c0_3 = arith.constant 0 : index
    %c0_4 = arith.constant 0 : index
    %c1 = arith.constant 1 : index
    %c0_5 = arith.constant 0 : index
    %2 = vector.load %arg1[%c0_3, %c0_4, %c1, %c0_5] : memref<1x18x9x64xf32, #tpu.memory_space<vmem>>, vector<1x1x8x64xf32>
    %3 = vector.shape_cast %2 : vector<1x1x8x64xf32> to vector<8x64xf32>
    %c0_6 = arith.constant 0 : index
    %c0_7 = arith.constant 0 : index
    %c0_8 = arith.constant 0 : index
    %c0_9 = arith.constant 0 : index
    %4 = vector.load %arg2[%c0_6, %c0_7, %c0_8, %c0_9] : memref<1x18x8x64xf32, #tpu.memory_space<vmem>>, vector<1x1x8x64xf32>
    %5 = vector.shape_cast %4 : vector<1x1x8x64xf32> to vector<8x64xf32>
    %6 = arith.maximumf %1, %3 : vector<8x64xf32>
    %7 = arith.maximumf %6, %5 : vector<8x64xf32>
    %c0_10 = arith.constant 0 : index
    %c0_11 = arith.constant 0 : index
    %c0_12 = arith.constant 0 : index
    %8 = vector.load %arg4[%c0_10, %c0_11, %c0_12] : memref<17x8x64xf32, #tpu.memory_space<vmem>>, vector<1x8x64xf32>
    %9 = vector.shape_cast %8 : vector<1x8x64xf32> to vector<8x64xf32>
    %10 = vector.shape_cast %7 : vector<8x64xf32> to vector<1x8x64xf32>
    tpu.vector_store %arg4[%c0_10, %c0_11, %c0_12], %10 {strides = array<i32>} : memref<17x8x64xf32, #tpu.memory_space<vmem>>, vector<1x8x64xf32>,
    %c0_13 = arith.constant 0 : index
    %c1_14 = arith.constant 1 : index
    %c0_15 = arith.constant 0 : index
    %c0_16 = arith.constant 0 : index
    %11 = vector.load %arg1[%c0_13, %c1_14, %c0_15, %c0_16] : memref<1x18x9x64xf32, #tpu.memory_space<vmem>>, vector<1x1x8x64xf32>
    %12 = vector.shape_cast %11 : vector<1x1x8x64xf32> to vector<8x64xf32>
    %c0_17 = arith.constant 0 : index
    %c1_18 = arith.constant 1 : index
    %c1_19 = arith.constant 1 : index
    %c0_20 = arith.constant 0 : index
    %13 = vector.load %arg1[%c0_17, %c1_18, %c1_19, %c0_20] : memref<1x18x9x64xf32, #tpu.memory_space<vmem>>, vector<1x1x8x64xf32>
    %14 = vector.shape_cast %13 : vector<1x1x8x64xf32> to vector<8x64xf32>
    %c0_21 = arith.constant 0 : index
    %c1_22 = arith.constant 1 : index
    %c0_23 = arith.constant 0 : index
    %c0_24 = arith.constant 0 : index
    %15 = vector.load %arg2[%c0_21, %c1_22, %c0_23, %c0_24] : memref<1x18x8x64xf32, #tpu.memory_space<vmem>>, vector<1x1x8x64xf32>
    %16 = vector.shape_cast %15 : vector<1x1x8x64xf32> to vector<8x64xf32>
    %17 = arith.maximumf %12, %14 : vector<8x64xf32>
    %18 = arith.maximumf %17, %16 : vector<8x64xf32>
    %c1_25 = arith.constant 1 : index
    %c0_26 = arith.constant 0 : index
    %c0_27 = arith.constant 0 : index
    %19 = vector.load %arg4[%c1_25, %c0_26, %c0_27] : memref<17x8x64xf32, #tpu.memory_space<vmem>>, vector<1x8x64xf32>
    %20 = vector.shape_cast %19 : vector<1x8x64xf32> to vector<8x64xf32>
    %21 = vector.shape_cast %18 : vector<8x64xf32> to vector<1x8x64xf32>
    tpu.vector_store %arg4[%c1_25, %c0_26, %c0_27], %21 {strides = array<i32>} : memref<17x8x64xf32, #tpu.memory_space<vmem>>, vector<1x8x64xf32>,
    %c0_28 = arith.constant 0 : index
    %c2 = arith.constant 2 : index
    %c0_29 = arith.constant 0 : index
    %c0_30 = arith.constant 0 : index
    %22 = vector.load %arg1[%c0_28, %c2, %c0_29, %c0_30] : memref<1x18x9x64xf32, #tpu.memory_space<vmem>>, vector<1x1x8x64xf32>
    %23 = vector.shape_cast %22 : vector<1x1x8x64xf32> to vector<8x64xf32>
    %c0_31 = arith.constant 0 : index
    %c2_32 = arith.constant 2 : index
    %c1_33 = arith.constant 1 : index
    %c0_34 = arith.constant 0 : index
    %24 = vector.load %arg1[%c0_31, %c2_32, %c1_33, %c0_34] : memref<1x18x9x64xf32, #tpu.memory_space<vmem>>, vector<1x1x8x64xf32>
    %25 = vector.shape_cast %24 : vector<1x1x8x64xf32> to vector<8x64xf32>
    %c0_35 = arith.constant 0 : index
    %c2_36 = arith.constant 2 : index
    %c0_37 = arith.constant 0 : index
    %c0_38 = arith.constant 0 : index
    %26 = vector.load %arg2[%c0_35, %c2_36, %c0_37, %c0_38] : memref<1x18x8x64xf32, #tpu.memory_space<vmem>>, vector<1x1x8x64xf32>
    %27 = vector.shape_cast %26 : vector<1x1x8x64xf32> to vector<8x64xf32>
    %28 = arith.maximumf %23, %25 : vector<8x64xf32>
    %29 = arith.maximumf %28, %27 : vector<8x64xf32>
    %c2_39 = arith.constant 2 : index
    %c0_40 = arith.constant 0 : index
    %c0_41 = arith.constant 0 : index
    %30 = vector.load %arg4[%c2_39, %c0_40, %c0_41] : memref<17x8x64xf32, #tpu.memory_space<vmem>>, vector<1x8x64xf32>
    %31 = vector.shape_cast %30 : vector<1x8x64xf32> to vector<8x64xf32>
    %32 = vector.shape_cast %29 : vector<8x64xf32> to vector<1x8x64xf32>
    tpu.vector_store %arg4[%c2_39, %c0_40, %c0_41], %32 {strides = array<i32>} : memref<17x8x64xf32, #tpu.memory_space<vmem>>, vector<1x8x64xf32>,
    %c0_42 = arith.constant 0 : index
    %c3 = arith.constant 3 : index
    %c0_43 = arith.constant 0 : index
    %c0_44 = arith.constant 0 : index
    %33 = vector.load %arg1[%c0_42, %c3, %c0_43, %c0_44] : memref<1x18x9x64xf32, #tpu.memory_space<vmem>>, vector<1x1x8x64xf32>
    %34 = vector.shape_cast %33 : vector<1x1x8x64xf32> to vector<8x64xf32>
    %c0_45 = arith.constant 0 : index
    %c3_46 = arith.constant 3 : index
    %c1_47 = arith.constant 1 : index
    %c0_48 = arith.constant 0 : index
    %35 = vector.load %arg1[%c0_45, %c3_46, %c1_47, %c0_48] : memref<1x18x9x64xf32, #tpu.memory_space<vmem>>, vector<1x1x8x64xf32>
    %36 = vector.shape_cast %35 : vector<1x1x8x64xf32> to vector<8x64xf32>
    %c0_49 = arith.constant 0 : index
    %c3_50 = arith.constant 3 : index
    %c0_51 = arith.constant 0 : index
    %c0_52 = arith.constant 0 : index
    %37 = vector.load %arg2[%c0_49, %c3_50, %c0_51, %c0_52] : memref<1x18x8x64xf32, #tpu.memory_space<vmem>>, vector<1x1x8x64xf32>
    %38 = vector.shape_cast %37 : vector<1x1x8x64xf32> to vector<8x64xf32>
    %39 = arith.maximumf %34, %36 : vector<8x64xf32>
    %40 = arith.maximumf %39, %38 : vector<8x64xf32>
    %c3_53 = arith.constant 3 : index
    %c0_54 = arith.constant 0 : index
    %c0_55 = arith.constant 0 : index
    %41 = vector.load %arg4[%c3_53, %c0_54, %c0_55] : memref<17x8x64xf32, #tpu.memory_space<vmem>>, vector<1x8x64xf32>
    %42 = vector.shape_cast %41 : vector<1x8x64xf32> to vector<8x64xf32>
    %43 = vector.shape_cast %40 : vector<8x64xf32> to vector<1x8x64xf32>
    tpu.vector_store %arg4[%c3_53, %c0_54, %c0_55], %43 {strides = array<i32>} : memref<17x8x64xf32, #tpu.memory_space<vmem>>, vector<1x8x64xf32>,
    %c0_56 = arith.constant 0 : index
    %c4 = arith.constant 4 : index
    %c0_57 = arith.constant 0 : index
    %c0_58 = arith.constant 0 : index
    %44 = vector.load %arg1[%c0_56, %c4, %c0_57, %c0_58] : memref<1x18x9x64xf32, #tpu.memory_space<vmem>>, vector<1x1x8x64xf32>
    %45 = vector.shape_cast %44 : vector<1x1x8x64xf32> to vector<8x64xf32>
    %c0_59 = arith.constant 0 : index
    %c4_60 = arith.constant 4 : index
    %c1_61 = arith.constant 1 : index
    %c0_62 = arith.constant 0 : index
    %46 = vector.load %arg1[%c0_59, %c4_60, %c1_61, %c0_62] : memref<1x18x9x64xf32, #tpu.memory_space<vmem>>, vector<1x1x8x64xf32>
    %47 = vector.shape_cast %46 : vector<1x1x8x64xf32> to vector<8x64xf32>
    %c0_63 = arith.constant 0 : index
    %c4_64 = arith.constant 4 : index
    %c0_65 = arith.constant 0 : index
    %c0_66 = arith.constant 0 : index
    %48 = vector.load %arg2[%c0_63, %c4_64, %c0_65, %c0_66] : memref<1x18x8x64xf32, #tpu.memory_space<vmem>>, vector<1x1x8x64xf32>
    %49 = vector.shape_cast %48 : vector<1x1x8x64xf32> to vector<8x64xf32>
    %50 = arith.maximumf %45, %47 : vector<8x64xf32>
    %51 = arith.maximumf %50, %49 : vector<8x64xf32>
    %c4_67 = arith.constant 4 : index
    %c0_68 = arith.constant 0 : index
    %c0_69 = arith.constant 0 : index
    %52 = vector.load %arg4[%c4_67, %c0_68, %c0_69] : memref<17x8x64xf32, #tpu.memory_space<vmem>>, vector<1x8x64xf32>
    %53 = vector.shape_cast %52 : vector<1x8x64xf32> to vector<8x64xf32>
    %54 = vector.shape_cast %51 : vector<8x64xf32> to vector<1x8x64xf32>
    tpu.vector_store %arg4[%c4_67, %c0_68, %c0_69], %54 {strides = array<i32>} : memref<17x8x64xf32, #tpu.memory_space<vmem>>, vector<1x8x64xf32>,
    %c0_70 = arith.constant 0 : index
    %c5 = arith.constant 5 : index
    %c0_71 = arith.constant 0 : index
    %c0_72 = arith.constant 0 : index
    %55 = vector.load %arg1[%c0_70, %c5, %c0_71, %c0_72] : memref<1x18x9x64xf32, #tpu.memory_space<vmem>>, vector<1x1x8x64xf32>
    %56 = vector.shape_cast %55 : vector<1x1x8x64xf32> to vector<8x64xf32>
    %c0_73 = arith.constant 0 : index
    %c5_74 = arith.constant 5 : index
    %c1_75 = arith.constant 1 : index
    %c0_76 = arith.constant 0 : index
    %57 = vector.load %arg1[%c0_73, %c5_74, %c1_75, %c0_76] : memref<1x18x9x64xf32, #tpu.memory_space<vmem>>, vector<1x1x8x64xf32>
    %58 = vector.shape_cast %57 : vector<1x1x8x64xf32> to vector<8x64xf32>
    %c0_77 = arith.constant 0 : index
    %c5_78 = arith.constant 5 : index
    %c0_79 = arith.constant 0 : index
    %c0_80 = arith.constant 0 : index
    %59 = vector.load %arg2[%c0_77, %c5_78, %c0_79, %c0_80] : memref<1x18x8x64xf32, #tpu.memory_space<vmem>>, vector<1x1x8x64xf32>
    %60 = vector.shape_cast %59 : vector<1x1x8x64xf32> to vector<8x64xf32>
    %61 = arith.maximumf %56, %58 : vector<8x64xf32>
    %62 = arith.maximumf %61, %60 : vector<8x64xf32>
    %c5_81 = arith.constant 5 : index
    %c0_82 = arith.constant 0 : index
    %c0_83 = arith.constant 0 : index
    %63 = vector.load %arg4[%c5_81, %c0_82, %c0_83] : memref<17x8x64xf32, #tpu.memory_space<vmem>>, vector<1x8x64xf32>
    %64 = vector.shape_cast %63 : vector<1x8x64xf32> to vector<8x64xf32>
    %65 = vector.shape_cast %62 : vector<8x64xf32> to vector<1x8x64xf32>
    tpu.vector_store %arg4[%c5_81, %c0_82, %c0_83], %65 {strides = array<i32>} : memref<17x8x64xf32, #tpu.memory_space<vmem>>, vector<1x8x64xf32>,
    %c0_84 = arith.constant 0 : index
    %c6 = arith.constant 6 : index
    %c0_85 = arith.constant 0 : index
    %c0_86 = arith.constant 0 : index
    %66 = vector.load %arg1[%c0_84, %c6, %c0_85, %c0_86] : memref<1x18x9x64xf32, #tpu.memory_space<vmem>>, vector<1x1x8x64xf32>
    %67 = vector.shape_cast %66 : vector<1x1x8x64xf32> to vector<8x64xf32>
    %c0_87 = arith.constant 0 : index
    %c6_88 = arith.constant 6 : index
    %c1_89 = arith.constant 1 : index
    %c0_90 = arith.constant 0 : index
    %68 = vector.load %arg1[%c0_87, %c6_88, %c1_89, %c0_90] : memref<1x18x9x64xf32, #tpu.memory_space<vmem>>, vector<1x1x8x64xf32>
    %69 = vector.shape_cast %68 : vector<1x1x8x64xf32> to vector<8x64xf32>
    %c0_91 = arith.constant 0 : index
    %c6_92 = arith.constant 6 : index
    %c0_93 = arith.constant 0 : index
    %c0_94 = arith.constant 0 : index
    %70 = vector.load %arg2[%c0_91, %c6_92, %c0_93, %c0_94] : memref<1x18x8x64xf32, #tpu.memory_space<vmem>>, vector<1x1x8x64xf32>
    %71 = vector.shape_cast %70 : vector<1x1x8x64xf32> to vector<8x64xf32>
    %72 = arith.maximumf %67, %69 : vector<8x64xf32>
    %73 = arith.maximumf %72, %71 : vector<8x64xf32>
    %c6_95 = arith.constant 6 : index
    %c0_96 = arith.constant 0 : index
    %c0_97 = arith.constant 0 : index
    %74 = vector.load %arg4[%c6_95, %c0_96, %c0_97] : memref<17x8x64xf32, #tpu.memory_space<vmem>>, vector<1x8x64xf32>
    %75 = vector.shape_cast %74 : vector<1x8x64xf32> to vector<8x64xf32>
    %76 = vector.shape_cast %73 : vector<8x64xf32> to vector<1x8x64xf32>
    tpu.vector_store %arg4[%c6_95, %c0_96, %c0_97], %76 {strides = array<i32>} : memref<17x8x64xf32, #tpu.memory_space<vmem>>, vector<1x8x64xf32>,
    %c0_98 = arith.constant 0 : index
    %c7 = arith.constant 7 : index
    %c0_99 = arith.constant 0 : index
    %c0_100 = arith.constant 0 : index
    %77 = vector.load %arg1[%c0_98, %c7, %c0_99, %c0_100] : memref<1x18x9x64xf32, #tpu.memory_space<vmem>>, vector<1x1x8x64xf32>
    %78 = vector.shape_cast %77 : vector<1x1x8x64xf32> to vector<8x64xf32>
    %c0_101 = arith.constant 0 : index
    %c7_102 = arith.constant 7 : index
    %c1_103 = arith.constant 1 : index
    %c0_104 = arith.constant 0 : index
    %79 = vector.load %arg1[%c0_101, %c7_102, %c1_103, %c0_104] : memref<1x18x9x64xf32, #tpu.memory_space<vmem>>, vector<1x1x8x64xf32>
    %80 = vector.shape_cast %79 : vector<1x1x8x64xf32> to vector<8x64xf32>
    %c0_105 = arith.constant 0 : index
    %c7_106 = arith.constant 7 : index
    %c0_107 = arith.constant 0 : index
    %c0_108 = arith.constant 0 : index
    %81 = vector.load %arg2[%c0_105, %c7_106, %c0_107, %c0_108] : memref<1x18x8x64xf32, #tpu.memory_space<vmem>>, vector<1x1x8x64xf32>
    %82 = vector.shape_cast %81 : vector<1x1x8x64xf32> to vector<8x64xf32>
    %83 = arith.maximumf %78, %80 : vector<8x64xf32>
    %84 = arith.maximumf %83, %82 : vector<8x64xf32>
    %c7_109 = arith.constant 7 : index
    %c0_110 = arith.constant 0 : index
    %c0_111 = arith.constant 0 : index
    %85 = vector.load %arg4[%c7_109, %c0_110, %c0_111] : memref<17x8x64xf32, #tpu.memory_space<vmem>>, vector<1x8x64xf32>
    %86 = vector.shape_cast %85 : vector<1x8x64xf32> to vector<8x64xf32>
    %87 = vector.shape_cast %84 : vector<8x64xf32> to vector<1x8x64xf32>
    tpu.vector_store %arg4[%c7_109, %c0_110, %c0_111], %87 {strides = array<i32>} : memref<17x8x64xf32, #tpu.memory_space<vmem>>, vector<1x8x64xf32>,
    %c0_112 = arith.constant 0 : index
    %c8 = arith.constant 8 : index
    %c0_113 = arith.constant 0 : index
    %c0_114 = arith.constant 0 : index
    %88 = vector.load %arg1[%c0_112, %c8, %c0_113, %c0_114] : memref<1x18x9x64xf32, #tpu.memory_space<vmem>>, vector<1x1x8x64xf32>
    %89 = vector.shape_cast %88 : vector<1x1x8x64xf32> to vector<8x64xf32>
    %c0_115 = arith.constant 0 : index
    %c8_116 = arith.constant 8 : index
    %c1_117 = arith.constant 1 : index
    %c0_118 = arith.constant 0 : index
    %90 = vector.load %arg1[%c0_115, %c8_116, %c1_117, %c0_118] : memref<1x18x9x64xf32, #tpu.memory_space<vmem>>, vector<1x1x8x64xf32>
    %91 = vector.shape_cast %90 : vector<1x1x8x64xf32> to vector<8x64xf32>
    %c0_119 = arith.constant 0 : index
    %c8_120 = arith.constant 8 : index
    %c0_121 = arith.constant 0 : index
    %c0_122 = arith.constant 0 : index
    %92 = vector.load %arg2[%c0_119, %c8_120, %c0_121, %c0_122] : memref<1x18x8x64xf32, #tpu.memory_space<vmem>>, vector<1x1x8x64xf32>
    %93 = vector.shape_cast %92 : vector<1x1x8x64xf32> to vector<8x64xf32>
    %94 = arith.maximumf %89, %91 : vector<8x64xf32>
    %95 = arith.maximumf %94, %93 : vector<8x64xf32>
    %c8_123 = arith.constant 8 : index
    %c0_124 = arith.constant 0 : index
    %c0_125 = arith.constant 0 : index
    %96 = vector.load %arg4[%c8_123, %c0_124, %c0_125] : memref<17x8x64xf32, #tpu.memory_space<vmem>>, vector<1x8x64xf32>
    %97 = vector.shape_cast %96 : vector<1x8x64xf32> to vector<8x64xf32>
    %98 = vector.shape_cast %95 : vector<8x64xf32> to vector<1x8x64xf32>
    tpu.vector_store %arg4[%c8_123, %c0_124, %c0_125], %98 {strides = array<i32>} : memref<17x8x64xf32, #tpu.memory_space<vmem>>, vector<1x8x64xf32>,
    %c0_126 = arith.constant 0 : index
    %c9 = arith.constant 9 : index
    %c0_127 = arith.constant 0 : index
    %c0_128 = arith.constant 0 : index
    %99 = vector.load %arg1[%c0_126, %c9, %c0_127, %c0_128] : memref<1x18x9x64xf32, #tpu.memory_space<vmem>>, vector<1x1x8x64xf32>
    %100 = vector.shape_cast %99 : vector<1x1x8x64xf32> to vector<8x64xf32>
    %c0_129 = arith.constant 0 : index
    %c9_130 = arith.constant 9 : index
    %c1_131 = arith.constant 1 : index
    %c0_132 = arith.constant 0 : index
    %101 = vector.load %arg1[%c0_129, %c9_130, %c1_131, %c0_132] : memref<1x18x9x64xf32, #tpu.memory_space<vmem>>, vector<1x1x8x64xf32>
    %102 = vector.shape_cast %101 : vector<1x1x8x64xf32> to vector<8x64xf32>
    %c0_133 = arith.constant 0 : index
    %c9_134 = arith.constant 9 : index
    %c0_135 = arith.constant 0 : index
    %c0_136 = arith.constant 0 : index
    %103 = vector.load %arg2[%c0_133, %c9_134, %c0_135, %c0_136] : memref<1x18x8x64xf32, #tpu.memory_space<vmem>>, vector<1x1x8x64xf32>
    %104 = vector.shape_cast %103 : vector<1x1x8x64xf32> to vector<8x64xf32>
    %105 = arith.maximumf %100, %102 : vector<8x64xf32>
    %106 = arith.maximumf %105, %104 : vector<8x64xf32>
    %c9_137 = arith.constant 9 : index
    %c0_138 = arith.constant 0 : index
    %c0_139 = arith.constant 0 : index
    %107 = vector.load %arg4[%c9_137, %c0_138, %c0_139] : memref<17x8x64xf32, #tpu.memory_space<vmem>>, vector<1x8x64xf32>
    %108 = vector.shape_cast %107 : vector<1x8x64xf32> to vector<8x64xf32>
    %109 = vector.shape_cast %106 : vector<8x64xf32> to vector<1x8x64xf32>
    tpu.vector_store %arg4[%c9_137, %c0_138, %c0_139], %109 {strides = array<i32>} : memref<17x8x64xf32, #tpu.memory_space<vmem>>, vector<1x8x64xf32>,
    %c0_140 = arith.constant 0 : index
    %c10 = arith.constant 10 : index
    %c0_141 = arith.constant 0 : index
    %c0_142 = arith.constant 0 : index
    %110 = vector.load %arg1[%c0_140, %c10, %c0_141, %c0_142] : memref<1x18x9x64xf32, #tpu.memory_space<vmem>>, vector<1x1x8x64xf32>
    %111 = vector.shape_cast %110 : vector<1x1x8x64xf32> to vector<8x64xf32>
    %c0_143 = arith.constant 0 : index
    %c10_144 = arith.constant 10 : index
    %c1_145 = arith.constant 1 : index
    %c0_146 = arith.constant 0 : index
    %112 = vector.load %arg1[%c0_143, %c10_144, %c1_145, %c0_146] : memref<1x18x9x64xf32, #tpu.memory_space<vmem>>, vector<1x1x8x64xf32>
    %113 = vector.shape_cast %112 : vector<1x1x8x64xf32> to vector<8x64xf32>
    %c0_147 = arith.constant 0 : index
    %c10_148 = arith.constant 10 : index
    %c0_149 = arith.constant 0 : index
    %c0_150 = arith.constant 0 : index
    %114 = vector.load %arg2[%c0_147, %c10_148, %c0_149, %c0_150] : memref<1x18x8x64xf32, #tpu.memory_space<vmem>>, vector<1x1x8x64xf32>
    %115 = vector.shape_cast %114 : vector<1x1x8x64xf32> to vector<8x64xf32>
    %116 = arith.maximumf %111, %113 : vector<8x64xf32>
    %117 = arith.maximumf %116, %115 : vector<8x64xf32>
    %c10_151 = arith.constant 10 : index
    %c0_152 = arith.constant 0 : index
    %c0_153 = arith.constant 0 : index
    %118 = vector.load %arg4[%c10_151, %c0_152, %c0_153] : memref<17x8x64xf32, #tpu.memory_space<vmem>>, vector<1x8x64xf32>
    %119 = vector.shape_cast %118 : vector<1x8x64xf32> to vector<8x64xf32>
    %120 = vector.shape_cast %117 : vector<8x64xf32> to vector<1x8x64xf32>
    tpu.vector_store %arg4[%c10_151, %c0_152, %c0_153], %120 {strides = array<i32>} : memref<17x8x64xf32, #tpu.memory_space<vmem>>, vector<1x8x64xf32>,
    %c0_154 = arith.constant 0 : index
    %c11 = arith.constant 11 : index
    %c0_155 = arith.constant 0 : index
    %c0_156 = arith.constant 0 : index
    %121 = vector.load %arg1[%c0_154, %c11, %c0_155, %c0_156] : memref<1x18x9x64xf32, #tpu.memory_space<vmem>>, vector<1x1x8x64xf32>
    %122 = vector.shape_cast %121 : vector<1x1x8x64xf32> to vector<8x64xf32>
    %c0_157 = arith.constant 0 : index
    %c11_158 = arith.constant 11 : index
    %c1_159 = arith.constant 1 : index
    %c0_160 = arith.constant 0 : index
    %123 = vector.load %arg1[%c0_157, %c11_158, %c1_159, %c0_160] : memref<1x18x9x64xf32, #tpu.memory_space<vmem>>, vector<1x1x8x64xf32>
    %124 = vector.shape_cast %123 : vector<1x1x8x64xf32> to vector<8x64xf32>
    %c0_161 = arith.constant 0 : index
    %c11_162 = arith.constant 11 : index
    %c0_163 = arith.constant 0 : index
    %c0_164 = arith.constant 0 : index
    %125 = vector.load %arg2[%c0_161, %c11_162, %c0_163, %c0_164] : memref<1x18x8x64xf32, #tpu.memory_space<vmem>>, vector<1x1x8x64xf32>
    %126 = vector.shape_cast %125 : vector<1x1x8x64xf32> to vector<8x64xf32>
    %127 = arith.maximumf %122, %124 : vector<8x64xf32>
    %128 = arith.maximumf %127, %126 : vector<8x64xf32>
    %c11_165 = arith.constant 11 : index
    %c0_166 = arith.constant 0 : index
    %c0_167 = arith.constant 0 : index
    %129 = vector.load %arg4[%c11_165, %c0_166, %c0_167] : memref<17x8x64xf32, #tpu.memory_space<vmem>>, vector<1x8x64xf32>
    %130 = vector.shape_cast %129 : vector<1x8x64xf32> to vector<8x64xf32>
    %131 = vector.shape_cast %128 : vector<8x64xf32> to vector<1x8x64xf32>
    tpu.vector_store %arg4[%c11_165, %c0_166, %c0_167], %131 {strides = array<i32>} : memref<17x8x64xf32, #tpu.memory_space<vmem>>, vector<1x8x64xf32>,
    %c0_168 = arith.constant 0 : index
    %c12 = arith.constant 12 : index
    %c0_169 = arith.constant 0 : index
    %c0_170 = arith.constant 0 : index
    %132 = vector.load %arg1[%c0_168, %c12, %c0_169, %c0_170] : memref<1x18x9x64xf32, #tpu.memory_space<vmem>>, vector<1x1x8x64xf32>
    %133 = vector.shape_cast %132 : vector<1x1x8x64xf32> to vector<8x64xf32>
    %c0_171 = arith.constant 0 : index
    %c12_172 = arith.constant 12 : index
    %c1_173 = arith.constant 1 : index
    %c0_174 = arith.constant 0 : index
    %134 = vector.load %arg1[%c0_171, %c12_172, %c1_173, %c0_174] : memref<1x18x9x64xf32, #tpu.memory_space<vmem>>, vector<1x1x8x64xf32>
    %135 = vector.shape_cast %134 : vector<1x1x8x64xf32> to vector<8x64xf32>
    %c0_175 = arith.constant 0 : index
    %c12_176 = arith.constant 12 : index
    %c0_177 = arith.constant 0 : index
    %c0_178 = arith.constant 0 : index
    %136 = vector.load %arg2[%c0_175, %c12_176, %c0_177, %c0_178] : memref<1x18x8x64xf32, #tpu.memory_space<vmem>>, vector<1x1x8x64xf32>
    %137 = vector.shape_cast %136 : vector<1x1x8x64xf32> to vector<8x64xf32>
    %138 = arith.maximumf %133, %135 : vector<8x64xf32>
    %139 = arith.maximumf %138, %137 : vector<8x64xf32>
    %c12_179 = arith.constant 12 : index
    %c0_180 = arith.constant 0 : index
    %c0_181 = arith.constant 0 : index
    %140 = vector.load %arg4[%c12_179, %c0_180, %c0_181] : memref<17x8x64xf32, #tpu.memory_space<vmem>>, vector<1x8x64xf32>
    %141 = vector.shape_cast %140 : vector<1x8x64xf32> to vector<8x64xf32>
    %142 = vector.shape_cast %139 : vector<8x64xf32> to vector<1x8x64xf32>
    tpu.vector_store %arg4[%c12_179, %c0_180, %c0_181], %142 {strides = array<i32>} : memref<17x8x64xf32, #tpu.memory_space<vmem>>, vector<1x8x64xf32>,
    %c0_182 = arith.constant 0 : index
    %c13 = arith.constant 13 : index
    %c0_183 = arith.constant 0 : index
    %c0_184 = arith.constant 0 : index
    %143 = vector.load %arg1[%c0_182, %c13, %c0_183, %c0_184] : memref<1x18x9x64xf32, #tpu.memory_space<vmem>>, vector<1x1x8x64xf32>
    %144 = vector.shape_cast %143 : vector<1x1x8x64xf32> to vector<8x64xf32>
    %c0_185 = arith.constant 0 : index
    %c13_186 = arith.constant 13 : index
    %c1_187 = arith.constant 1 : index
    %c0_188 = arith.constant 0 : index
    %145 = vector.load %arg1[%c0_185, %c13_186, %c1_187, %c0_188] : memref<1x18x9x64xf32, #tpu.memory_space<vmem>>, vector<1x1x8x64xf32>
    %146 = vector.shape_cast %145 : vector<1x1x8x64xf32> to vector<8x64xf32>
    %c0_189 = arith.constant 0 : index
    %c13_190 = arith.constant 13 : index
    %c0_191 = arith.constant 0 : index
    %c0_192 = arith.constant 0 : index
    %147 = vector.load %arg2[%c0_189, %c13_190, %c0_191, %c0_192] : memref<1x18x8x64xf32, #tpu.memory_space<vmem>>, vector<1x1x8x64xf32>
    %148 = vector.shape_cast %147 : vector<1x1x8x64xf32> to vector<8x64xf32>
    %149 = arith.maximumf %144, %146 : vector<8x64xf32>
    %150 = arith.maximumf %149, %148 : vector<8x64xf32>
    %c13_193 = arith.constant 13 : index
    %c0_194 = arith.constant 0 : index
    %c0_195 = arith.constant 0 : index
    %151 = vector.load %arg4[%c13_193, %c0_194, %c0_195] : memref<17x8x64xf32, #tpu.memory_space<vmem>>, vector<1x8x64xf32>
    %152 = vector.shape_cast %151 : vector<1x8x64xf32> to vector<8x64xf32>
    %153 = vector.shape_cast %150 : vector<8x64xf32> to vector<1x8x64xf32>
    tpu.vector_store %arg4[%c13_193, %c0_194, %c0_195], %153 {strides = array<i32>} : memref<17x8x64xf32, #tpu.memory_space<vmem>>, vector<1x8x64xf32>,
    %c0_196 = arith.constant 0 : index
    %c14 = arith.constant 14 : index
    %c0_197 = arith.constant 0 : index
    %c0_198 = arith.constant 0 : index
    %154 = vector.load %arg1[%c0_196, %c14, %c0_197, %c0_198] : memref<1x18x9x64xf32, #tpu.memory_space<vmem>>, vector<1x1x8x64xf32>
    %155 = vector.shape_cast %154 : vector<1x1x8x64xf32> to vector<8x64xf32>
    %c0_199 = arith.constant 0 : index
    %c14_200 = arith.constant 14 : index
    %c1_201 = arith.constant 1 : index
    %c0_202 = arith.constant 0 : index
    %156 = vector.load %arg1[%c0_199, %c14_200, %c1_201, %c0_202] : memref<1x18x9x64xf32, #tpu.memory_space<vmem>>, vector<1x1x8x64xf32>
    %157 = vector.shape_cast %156 : vector<1x1x8x64xf32> to vector<8x64xf32>
    %c0_203 = arith.constant 0 : index
    %c14_204 = arith.constant 14 : index
    %c0_205 = arith.constant 0 : index
    %c0_206 = arith.constant 0 : index
    %158 = vector.load %arg2[%c0_203, %c14_204, %c0_205, %c0_206] : memref<1x18x8x64xf32, #tpu.memory_space<vmem>>, vector<1x1x8x64xf32>
    %159 = vector.shape_cast %158 : vector<1x1x8x64xf32> to vector<8x64xf32>
    %160 = arith.maximumf %155, %157 : vector<8x64xf32>
    %161 = arith.maximumf %160, %159 : vector<8x64xf32>
    %c14_207 = arith.constant 14 : index
    %c0_208 = arith.constant 0 : index
    %c0_209 = arith.constant 0 : index
    %162 = vector.load %arg4[%c14_207, %c0_208, %c0_209] : memref<17x8x64xf32, #tpu.memory_space<vmem>>, vector<1x8x64xf32>
    %163 = vector.shape_cast %162 : vector<1x8x64xf32> to vector<8x64xf32>
    %164 = vector.shape_cast %161 : vector<8x64xf32> to vector<1x8x64xf32>
    tpu.vector_store %arg4[%c14_207, %c0_208, %c0_209], %164 {strides = array<i32>} : memref<17x8x64xf32, #tpu.memory_space<vmem>>, vector<1x8x64xf32>,
    %c0_210 = arith.constant 0 : index
    %c15 = arith.constant 15 : index
    %c0_211 = arith.constant 0 : index
    %c0_212 = arith.constant 0 : index
    %165 = vector.load %arg1[%c0_210, %c15, %c0_211, %c0_212] : memref<1x18x9x64xf32, #tpu.memory_space<vmem>>, vector<1x1x8x64xf32>
    %166 = vector.shape_cast %165 : vector<1x1x8x64xf32> to vector<8x64xf32>
    %c0_213 = arith.constant 0 : index
    %c15_214 = arith.constant 15 : index
    %c1_215 = arith.constant 1 : index
    %c0_216 = arith.constant 0 : index
    %167 = vector.load %arg1[%c0_213, %c15_214, %c1_215, %c0_216] : memref<1x18x9x64xf32, #tpu.memory_space<vmem>>, vector<1x1x8x64xf32>
    %168 = vector.shape_cast %167 : vector<1x1x8x64xf32> to vector<8x64xf32>
    %c0_217 = arith.constant 0 : index
    %c15_218 = arith.constant 15 : index
    %c0_219 = arith.constant 0 : index
    %c0_220 = arith.constant 0 : index
    %169 = vector.load %arg2[%c0_217, %c15_218, %c0_219, %c0_220] : memref<1x18x8x64xf32, #tpu.memory_space<vmem>>, vector<1x1x8x64xf32>
    %170 = vector.shape_cast %169 : vector<1x1x8x64xf32> to vector<8x64xf32>
    %171 = arith.maximumf %166, %168 : vector<8x64xf32>
    %172 = arith.maximumf %171, %170 : vector<8x64xf32>
    %c15_221 = arith.constant 15 : index
    %c0_222 = arith.constant 0 : index
    %c0_223 = arith.constant 0 : index
    %173 = vector.load %arg4[%c15_221, %c0_222, %c0_223] : memref<17x8x64xf32, #tpu.memory_space<vmem>>, vector<1x8x64xf32>
    %174 = vector.shape_cast %173 : vector<1x8x64xf32> to vector<8x64xf32>
    %175 = vector.shape_cast %172 : vector<8x64xf32> to vector<1x8x64xf32>
    tpu.vector_store %arg4[%c15_221, %c0_222, %c0_223], %175 {strides = array<i32>} : memref<17x8x64xf32, #tpu.memory_space<vmem>>, vector<1x8x64xf32>,
    %c0_224 = arith.constant 0 : index
    %c16 = arith.constant 16 : index
    %c0_225 = arith.constant 0 : index
    %c0_226 = arith.constant 0 : index
    %176 = vector.load %arg1[%c0_224, %c16, %c0_225, %c0_226] : memref<1x18x9x64xf32, #tpu.memory_space<vmem>>, vector<1x1x8x64xf32>
    %177 = vector.shape_cast %176 : vector<1x1x8x64xf32> to vector<8x64xf32>
    %c0_227 = arith.constant 0 : index
    %c16_228 = arith.constant 16 : index
    %c1_229 = arith.constant 1 : index
    %c0_230 = arith.constant 0 : index
    %178 = vector.load %arg1[%c0_227, %c16_228, %c1_229, %c0_230] : memref<1x18x9x64xf32, #tpu.memory_space<vmem>>, vector<1x1x8x64xf32>
    %179 = vector.shape_cast %178 : vector<1x1x8x64xf32> to vector<8x64xf32>
    %c0_231 = arith.constant 0 : index
    %c16_232 = arith.constant 16 : index
    %c0_233 = arith.constant 0 : index
    %c0_234 = arith.constant 0 : index
    %180 = vector.load %arg2[%c0_231, %c16_232, %c0_233, %c0_234] : memref<1x18x8x64xf32, #tpu.memory_space<vmem>>, vector<1x1x8x64xf32>
    %181 = vector.shape_cast %180 : vector<1x1x8x64xf32> to vector<8x64xf32>
    %182 = arith.maximumf %177, %179 : vector<8x64xf32>
    %183 = arith.maximumf %182, %181 : vector<8x64xf32>
    %c16_235 = arith.constant 16 : index
    %c0_236 = arith.constant 0 : index
    %c0_237 = arith.constant 0 : index
    %184 = vector.load %arg4[%c16_235, %c0_236, %c0_237] : memref<17x8x64xf32, #tpu.memory_space<vmem>>, vector<1x8x64xf32>
    %185 = vector.shape_cast %184 : vector<1x8x64xf32> to vector<8x64xf32>
    %186 = vector.shape_cast %183 : vector<8x64xf32> to vector<1x8x64xf32>
    tpu.vector_store %arg4[%c16_235, %c0_236, %c0_237], %186 {strides = array<i32>} : memref<17x8x64xf32, #tpu.memory_space<vmem>>, vector<1x8x64xf32>,
    %c0_238 = arith.constant 0 : index
    %c0_239 = arith.constant 0 : index
    %c0_240 = arith.constant 0 : index
    %187 = vector.load %arg4[%c0_238, %c0_239, %c0_240] : memref<17x8x64xf32, #tpu.memory_space<vmem>>, vector<1x8x64xf32>
    %188 = vector.shape_cast %187 : vector<1x8x64xf32> to vector<8x64xf32>
    %c1_241 = arith.constant 1 : index
    %c0_242 = arith.constant 0 : index
    %c0_243 = arith.constant 0 : index
    %189 = vector.load %arg4[%c1_241, %c0_242, %c0_243] : memref<17x8x64xf32, #tpu.memory_space<vmem>>, vector<1x8x64xf32>
    %190 = vector.shape_cast %189 : vector<1x8x64xf32> to vector<8x64xf32>
    %191 = arith.maximumf %188, %190 : vector<8x64xf32>
    %c2_244 = arith.constant 2 : index
    %c0_245 = arith.constant 0 : index
    %c0_246 = arith.constant 0 : index
    %192 = vector.load %arg4[%c2_244, %c0_245, %c0_246] : memref<17x8x64xf32, #tpu.memory_space<vmem>>, vector<1x8x64xf32>
    %193 = vector.shape_cast %192 : vector<1x8x64xf32> to vector<8x64xf32>
    %194 = arith.maximumf %191, %193 : vector<8x64xf32>
    %c0_247 = arith.constant 0 : index
    %c0_248 = arith.constant 0 : index
    %c0_249 = arith.constant 0 : index
    %c0_250 = arith.constant 0 : index
    %195 = vector.load %arg3[%c0_247, %c0_248, %c0_249, %c0_250] : memref<1x8x8x64xf32, #tpu.memory_space<vmem>>, vector<1x1x8x64xf32>
    %196 = vector.shape_cast %195 : vector<1x1x8x64xf32> to vector<8x64xf32>
    %197 = vector.shape_cast %194 : vector<8x64xf32> to vector<1x1x8x64xf32>
    tpu.vector_store %arg3[%c0_247, %c0_248, %c0_249, %c0_250], %197 {strides = array<i32>} : memref<1x8x8x64xf32, #tpu.memory_space<vmem>>, vector<1x1x8x64xf32>,
    %c2_251 = arith.constant 2 : index
    %c0_252 = arith.constant 0 : index
    %c0_253 = arith.constant 0 : index
    %198 = vector.load %arg4[%c2_251, %c0_252, %c0_253] : memref<17x8x64xf32, #tpu.memory_space<vmem>>, vector<1x8x64xf32>
    %199 = vector.shape_cast %198 : vector<1x8x64xf32> to vector<8x64xf32>
    %c3_254 = arith.constant 3 : index
    %c0_255 = arith.constant 0 : index
    %c0_256 = arith.constant 0 : index
    %200 = vector.load %arg4[%c3_254, %c0_255, %c0_256] : memref<17x8x64xf32, #tpu.memory_space<vmem>>, vector<1x8x64xf32>
    %201 = vector.shape_cast %200 : vector<1x8x64xf32> to vector<8x64xf32>
    %202 = arith.maximumf %199, %201 : vector<8x64xf32>
    %c4_257 = arith.constant 4 : index
    %c0_258 = arith.constant 0 : index
    %c0_259 = arith.constant 0 : index
    %203 = vector.load %arg4[%c4_257, %c0_258, %c0_259] : memref<17x8x64xf32, #tpu.memory_space<vmem>>, vector<1x8x64xf32>
    %204 = vector.shape_cast %203 : vector<1x8x64xf32> to vector<8x64xf32>
    %205 = arith.maximumf %202, %204 : vector<8x64xf32>
    %c0_260 = arith.constant 0 : index
    %c1_261 = arith.constant 1 : index
    %c0_262 = arith.constant 0 : index
    %c0_263 = arith.constant 0 : index
    %206 = vector.load %arg3[%c0_260, %c1_261, %c0_262, %c0_263] : memref<1x8x8x64xf32, #tpu.memory_space<vmem>>, vector<1x1x8x64xf32>
    %207 = vector.shape_cast %206 : vector<1x1x8x64xf32> to vector<8x64xf32>
    %208 = vector.shape_cast %205 : vector<8x64xf32> to vector<1x1x8x64xf32>
    tpu.vector_store %arg3[%c0_260, %c1_261, %c0_262, %c0_263], %208 {strides = array<i32>} : memref<1x8x8x64xf32, #tpu.memory_space<vmem>>, vector<1x1x8x64xf32>,
    %c4_264 = arith.constant 4 : index
    %c0_265 = arith.constant 0 : index
    %c0_266 = arith.constant 0 : index
    %209 = vector.load %arg4[%c4_264, %c0_265, %c0_266] : memref<17x8x64xf32, #tpu.memory_space<vmem>>, vector<1x8x64xf32>
    %210 = vector.shape_cast %209 : vector<1x8x64xf32> to vector<8x64xf32>
    %c5_267 = arith.constant 5 : index
    %c0_268 = arith.constant 0 : index
    %c0_269 = arith.constant 0 : index
    %211 = vector.load %arg4[%c5_267, %c0_268, %c0_269] : memref<17x8x64xf32, #tpu.memory_space<vmem>>, vector<1x8x64xf32>
    %212 = vector.shape_cast %211 : vector<1x8x64xf32> to vector<8x64xf32>
    %213 = arith.maximumf %210, %212 : vector<8x64xf32>
    %c6_270 = arith.constant 6 : index
    %c0_271 = arith.constant 0 : index
    %c0_272 = arith.constant 0 : index
    %214 = vector.load %arg4[%c6_270, %c0_271, %c0_272] : memref<17x8x64xf32, #tpu.memory_space<vmem>>, vector<1x8x64xf32>
    %215 = vector.shape_cast %214 : vector<1x8x64xf32> to vector<8x64xf32>
    %216 = arith.maximumf %213, %215 : vector<8x64xf32>
    %c0_273 = arith.constant 0 : index
    %c2_274 = arith.constant 2 : index
    %c0_275 = arith.constant 0 : index
    %c0_276 = arith.constant 0 : index
    %217 = vector.load %arg3[%c0_273, %c2_274, %c0_275, %c0_276] : memref<1x8x8x64xf32, #tpu.memory_space<vmem>>, vector<1x1x8x64xf32>
    %218 = vector.shape_cast %217 : vector<1x1x8x64xf32> to vector<8x64xf32>
    %219 = vector.shape_cast %216 : vector<8x64xf32> to vector<1x1x8x64xf32>
    tpu.vector_store %arg3[%c0_273, %c2_274, %c0_275, %c0_276], %219 {strides = array<i32>} : memref<1x8x8x64xf32, #tpu.memory_space<vmem>>, vector<1x1x8x64xf32>,
    %c6_277 = arith.constant 6 : index
    %c0_278 = arith.constant 0 : index
    %c0_279 = arith.constant 0 : index
    %220 = vector.load %arg4[%c6_277, %c0_278, %c0_279] : memref<17x8x64xf32, #tpu.memory_space<vmem>>, vector<1x8x64xf32>
    %221 = vector.shape_cast %220 : vector<1x8x64xf32> to vector<8x64xf32>
    %c7_280 = arith.constant 7 : index
    %c0_281 = arith.constant 0 : index
    %c0_282 = arith.constant 0 : index
    %222 = vector.load %arg4[%c7_280, %c0_281, %c0_282] : memref<17x8x64xf32, #tpu.memory_space<vmem>>, vector<1x8x64xf32>
    %223 = vector.shape_cast %222 : vector<1x8x64xf32> to vector<8x64xf32>
    %224 = arith.maximumf %221, %223 : vector<8x64xf32>
    %c8_283 = arith.constant 8 : index
    %c0_284 = arith.constant 0 : index
    %c0_285 = arith.constant 0 : index
    %225 = vector.load %arg4[%c8_283, %c0_284, %c0_285] : memref<17x8x64xf32, #tpu.memory_space<vmem>>, vector<1x8x64xf32>
    %226 = vector.shape_cast %225 : vector<1x8x64xf32> to vector<8x64xf32>
    %227 = arith.maximumf %224, %226 : vector<8x64xf32>
    %c0_286 = arith.constant 0 : index
    %c3_287 = arith.constant 3 : index
    %c0_288 = arith.constant 0 : index
    %c0_289 = arith.constant 0 : index
    %228 = vector.load %arg3[%c0_286, %c3_287, %c0_288, %c0_289] : memref<1x8x8x64xf32, #tpu.memory_space<vmem>>, vector<1x1x8x64xf32>
    %229 = vector.shape_cast %228 : vector<1x1x8x64xf32> to vector<8x64xf32>
    %230 = vector.shape_cast %227 : vector<8x64xf32> to vector<1x1x8x64xf32>
    tpu.vector_store %arg3[%c0_286, %c3_287, %c0_288, %c0_289], %230 {strides = array<i32>} : memref<1x8x8x64xf32, #tpu.memory_space<vmem>>, vector<1x1x8x64xf32>,
    %c8_290 = arith.constant 8 : index
    %c0_291 = arith.constant 0 : index
    %c0_292 = arith.constant 0 : index
    %231 = vector.load %arg4[%c8_290, %c0_291, %c0_292] : memref<17x8x64xf32, #tpu.memory_space<vmem>>, vector<1x8x64xf32>
    %232 = vector.shape_cast %231 : vector<1x8x64xf32> to vector<8x64xf32>
    %c9_293 = arith.constant 9 : index
    %c0_294 = arith.constant 0 : index
    %c0_295 = arith.constant 0 : index
    %233 = vector.load %arg4[%c9_293, %c0_294, %c0_295] : memref<17x8x64xf32, #tpu.memory_space<vmem>>, vector<1x8x64xf32>
    %234 = vector.shape_cast %233 : vector<1x8x64xf32> to vector<8x64xf32>
    %235 = arith.maximumf %232, %234 : vector<8x64xf32>
    %c10_296 = arith.constant 10 : index
    %c0_297 = arith.constant 0 : index
    %c0_298 = arith.constant 0 : index
    %236 = vector.load %arg4[%c10_296, %c0_297, %c0_298] : memref<17x8x64xf32, #tpu.memory_space<vmem>>, vector<1x8x64xf32>
    %237 = vector.shape_cast %236 : vector<1x8x64xf32> to vector<8x64xf32>
    %238 = arith.maximumf %235, %237 : vector<8x64xf32>
    %c0_299 = arith.constant 0 : index
    %c4_300 = arith.constant 4 : index
    %c0_301 = arith.constant 0 : index
    %c0_302 = arith.constant 0 : index
    %239 = vector.load %arg3[%c0_299, %c4_300, %c0_301, %c0_302] : memref<1x8x8x64xf32, #tpu.memory_space<vmem>>, vector<1x1x8x64xf32>
    %240 = vector.shape_cast %239 : vector<1x1x8x64xf32> to vector<8x64xf32>
    %241 = vector.shape_cast %238 : vector<8x64xf32> to vector<1x1x8x64xf32>
    tpu.vector_store %arg3[%c0_299, %c4_300, %c0_301, %c0_302], %241 {strides = array<i32>} : memref<1x8x8x64xf32, #tpu.memory_space<vmem>>, vector<1x1x8x64xf32>,
    %c10_303 = arith.constant 10 : index
    %c0_304 = arith.constant 0 : index
    %c0_305 = arith.constant 0 : index
    %242 = vector.load %arg4[%c10_303, %c0_304, %c0_305] : memref<17x8x64xf32, #tpu.memory_space<vmem>>, vector<1x8x64xf32>
    %243 = vector.shape_cast %242 : vector<1x8x64xf32> to vector<8x64xf32>
    %c11_306 = arith.constant 11 : index
    %c0_307 = arith.constant 0 : index
    %c0_308 = arith.constant 0 : index
    %244 = vector.load %arg4[%c11_306, %c0_307, %c0_308] : memref<17x8x64xf32, #tpu.memory_space<vmem>>, vector<1x8x64xf32>
    %245 = vector.shape_cast %244 : vector<1x8x64xf32> to vector<8x64xf32>
    %246 = arith.maximumf %243, %245 : vector<8x64xf32>
    %c12_309 = arith.constant 12 : index
    %c0_310 = arith.constant 0 : index
    %c0_311 = arith.constant 0 : index
    %247 = vector.load %arg4[%c12_309, %c0_310, %c0_311] : memref<17x8x64xf32, #tpu.memory_space<vmem>>, vector<1x8x64xf32>
    %248 = vector.shape_cast %247 : vector<1x8x64xf32> to vector<8x64xf32>
    %249 = arith.maximumf %246, %248 : vector<8x64xf32>
    %c0_312 = arith.constant 0 : index
    %c5_313 = arith.constant 5 : index
    %c0_314 = arith.constant 0 : index
    %c0_315 = arith.constant 0 : index
    %250 = vector.load %arg3[%c0_312, %c5_313, %c0_314, %c0_315] : memref<1x8x8x64xf32, #tpu.memory_space<vmem>>, vector<1x1x8x64xf32>
    %251 = vector.shape_cast %250 : vector<1x1x8x64xf32> to vector<8x64xf32>
    %252 = vector.shape_cast %249 : vector<8x64xf32> to vector<1x1x8x64xf32>
    tpu.vector_store %arg3[%c0_312, %c5_313, %c0_314, %c0_315], %252 {strides = array<i32>} : memref<1x8x8x64xf32, #tpu.memory_space<vmem>>, vector<1x1x8x64xf32>,
    %c12_316 = arith.constant 12 : index
    %c0_317 = arith.constant 0 : index
    %c0_318 = arith.constant 0 : index
    %253 = vector.load %arg4[%c12_316, %c0_317, %c0_318] : memref<17x8x64xf32, #tpu.memory_space<vmem>>, vector<1x8x64xf32>
    %254 = vector.shape_cast %253 : vector<1x8x64xf32> to vector<8x64xf32>
    %c13_319 = arith.constant 13 : index
    %c0_320 = arith.constant 0 : index
    %c0_321 = arith.constant 0 : index
    %255 = vector.load %arg4[%c13_319, %c0_320, %c0_321] : memref<17x8x64xf32, #tpu.memory_space<vmem>>, vector<1x8x64xf32>
    %256 = vector.shape_cast %255 : vector<1x8x64xf32> to vector<8x64xf32>
    %257 = arith.maximumf %254, %256 : vector<8x64xf32>
    %c14_322 = arith.constant 14 : index
    %c0_323 = arith.constant 0 : index
    %c0_324 = arith.constant 0 : index
    %258 = vector.load %arg4[%c14_322, %c0_323, %c0_324] : memref<17x8x64xf32, #tpu.memory_space<vmem>>, vector<1x8x64xf32>
    %259 = vector.shape_cast %258 : vector<1x8x64xf32> to vector<8x64xf32>
    %260 = arith.maximumf %257, %259 : vector<8x64xf32>
    %c0_325 = arith.constant 0 : index
    %c6_326 = arith.constant 6 : index
    %c0_327 = arith.constant 0 : index
    %c0_328 = arith.constant 0 : index
    %261 = vector.load %arg3[%c0_325, %c6_326, %c0_327, %c0_328] : memref<1x8x8x64xf32, #tpu.memory_space<vmem>>, vector<1x1x8x64xf32>
    %262 = vector.shape_cast %261 : vector<1x1x8x64xf32> to vector<8x64xf32>
    %263 = vector.shape_cast %260 : vector<8x64xf32> to vector<1x1x8x64xf32>
    tpu.vector_store %arg3[%c0_325, %c6_326, %c0_327, %c0_328], %263 {strides = array<i32>} : memref<1x8x8x64xf32, #tpu.memory_space<vmem>>, vector<1x1x8x64xf32>,
    %c14_329 = arith.constant 14 : index
    %c0_330 = arith.constant 0 : index
    %c0_331 = arith.constant 0 : index
    %264 = vector.load %arg4[%c14_329, %c0_330, %c0_331] : memref<17x8x64xf32, #tpu.memory_space<vmem>>, vector<1x8x64xf32>
    %265 = vector.shape_cast %264 : vector<1x8x64xf32> to vector<8x64xf32>
    %c15_332 = arith.constant 15 : index
    %c0_333 = arith.constant 0 : index
    %c0_334 = arith.constant 0 : index
    %266 = vector.load %arg4[%c15_332, %c0_333, %c0_334] : memref<17x8x64xf32, #tpu.memory_space<vmem>>, vector<1x8x64xf32>
    %267 = vector.shape_cast %266 : vector<1x8x64xf32> to vector<8x64xf32>
    %268 = arith.maximumf %265, %267 : vector<8x64xf32>
    %c16_335 = arith.constant 16 : index
    %c0_336 = arith.constant 0 : index
    %c0_337 = arith.constant 0 : index
    %269 = vector.load %arg4[%c16_335, %c0_336, %c0_337] : memref<17x8x64xf32, #tpu.memory_space<vmem>>, vector<1x8x64xf32>
    %270 = vector.shape_cast %269 : vector<1x8x64xf32> to vector<8x64xf32>
    %271 = arith.maximumf %268, %270 : vector<8x64xf32>
    %c0_338 = arith.constant 0 : index
    %c7_339 = arith.constant 7 : index
    %c0_340 = arith.constant 0 : index
    %c0_341 = arith.constant 0 : index
    %272 = vector.load %arg3[%c0_338, %c7_339, %c0_340, %c0_341] : memref<1x8x8x64xf32, #tpu.memory_space<vmem>>, vector<1x1x8x64xf32>
    %273 = vector.shape_cast %272 : vector<1x1x8x64xf32> to vector<8x64xf32>
    %274 = vector.shape_cast %271 : vector<8x64xf32> to vector<1x1x8x64xf32>
    tpu.vector_store %arg3[%c0_338, %c7_339, %c0_340, %c0_341], %274 {strides = array<i32>} : memref<1x8x8x64xf32, #tpu.memory_space<vmem>>, vector<1x1x8x64xf32>,
    return
  }
  func.func @transform_0(%arg0: i32) -> (i32, i32, i32, i32) {
    %c0_i32 = arith.constant 0 : i32
    %c0_i32_0 = arith.constant 0 : i32
    %c0_i32_1 = arith.constant 0 : i32
    %c0_i32_2 = arith.constant 0 : i32
    return %arg0, %c0_i32, %c0_i32_0, %c0_i32_1 : i32, i32, i32, i32
  }
  func.func @transform_1(%arg0: i32) -> (i32, i32, i32, i32) {
    %c0_i32 = arith.constant 0 : i32
    %c0_i32_0 = arith.constant 0 : i32
    %c0_i32_1 = arith.constant 0 : i32
    %c0_i32_2 = arith.constant 0 : i32
    return %arg0, %c0_i32, %c0_i32_0, %c0_i32_1 : i32, i32, i32, i32
  }
  func.func @transform_2(%arg0: i32) -> (i32, i32, i32, i32) {
    %c0_i32 = arith.constant 0 : i32
    %c0_i32_0 = arith.constant 0 : i32
    %c0_i32_1 = arith.constant 0 : i32
    %c0_i32_2 = arith.constant 0 : i32
    return %arg0, %c0_i32, %c0_i32_0, %c0_i32_1 : i32, i32, i32, i32
  }
}

</mosaic_0001>

<llo_original>
// kernel: _lambda_.2
$region0: #{_lambda_.2}
  #allocation0 [shape = 'u32[]', space=smem, size = 0x4, offset = 0x4, fixed_abs, tag = 'smem constant byte address 0x4 - core index']
  #allocation1 [shape = 'u32[144,128]{1,0:T(1,128)}', space=vmem, size = 0x12000, scoped, tag = 'internal scratch']
  %s0 = inlined_call_operand.vmem [shape: bf16[512,147], index: 0, kind: input, shape index: {}]
  %s1 = inlined_call_operand.vmem [shape: bf16[147,64], index: 1, kind: input, shape index: {}]
  %s2 = inlined_call_operand.vmem [shape: f32[1,64], index: 2, kind: input, shape index: {}]
  %s3 = inlined_call_operand.vmem [shape: f32[512,64], index: 3, kind: output, shape index: {}]
  %s4 = sld [smem:[#allocation0]]
  $region45: #{_lambda_.2} parent=0
    _
  %s6 = ssub.s32 1, %s4
  %s7 = scalar_select 0, %s6, %s4
  loop: start=0, step=1, limit=6
  $region2: #{_lambda_.2} parent=0 // loop_pre_header
    _
  $region3: #{_lambda_.2} parent=0 // loop_header
    %s9 = sphi 0, %s13
    %p10 = scmp.ge.s32.totalorder %s9, 6
    %s19 = sphi 0, %s21
    %s22 = sphi 0, %s19
    %s23 = sphi 0, %s22
    %s39 = sphi 0, %s23
    %s43 = sphi 0, %s43
    %s45 = sphi 0, %s43
    %s46 = sphi 0, %s45
    %s60 = sphi 0, %s46
    %s64 = sphi 0, %s64
    %s66 = sphi 0, %s64
    %s67 = sphi 0, %s66
    %s81 = sphi 0, %s67
    %s87 = sphi 0, %s89
    %s90 = sphi 0, %s87
    %s91 = sphi 0, %s90
    %s107 = sphi 0, %s91
  $region4: #{_lambda_.2} parent=0 // loop_header_branch
    %12 = sbr.rel (%p10) target = $region8
  $region5: #{_lambda_.2} parent=0 // loop_body
    %s14 = ssub.s32 %s9, 1
    %s15 = ssub.s32 %s9, 2
    %s16 = sadd.s32 %s9, 1
    %s17 = ssub.s32 %s9, %s16
    %p18 = scmp.eq.s32.totalorder %s17, 0
    %s20 = sadd.s32 %s19, 1
    %s21 = scalar_select %p18, %s19, %s20
    %p24 = pneg %p18
    %p25 = scmp.eq.s32.totalorder %s9, 3
    %p26 = por %p24, %p25
    %p27 = scmp.ne.s32.totalorder %s19, %s22
    %p28 = scmp.eq.s32.totalorder %s9, 0
    %p29 = por %p27, %p28
    %p30 = scmp.ne.s32.totalorder %s19, %s22
    %p31 = scmp.eq.s32.totalorder %s14, 3
    %p32 = por %p30, %p31
    %p33 = scmp.ne.s32.totalorder %s22, %s23
    %p34 = scmp.eq.s32.totalorder %s14, 0
    %p35 = por %p33, %p34
    %p36 = scmp.ne.s32.totalorder %s22, %s23
    %p37 = scmp.eq.s32.totalorder %s15, 3
    %p38 = por %p36, %p37
    %p40 = scmp.ne.s32.totalorder %s23, %s39
    %p41 = scmp.eq.s32.totalorder %s15, 0
    %p42 = por %p40, %p41
    %s44 = sadd.s32 %s43, 1
    %p47 = scmp.eq.s32.totalorder %s9, 3
    %p48 = scmp.ne.s32.totalorder %s43, %s45
    %p49 = scmp.eq.s32.totalorder %s9, 0
    %p50 = por %p48, %p49
    %p51 = scmp.ne.s32.totalorder %s43, %s45
    %p52 = scmp.eq.s32.totalorder %s14, 3
    %p53 = por %p51, %p52
    %p54 = scmp.ne.s32.totalorder %s45, %s46
    %p55 = scmp.eq.s32.totalorder %s14, 0
    %p56 = por %p54, %p55
    %p57 = scmp.ne.s32.totalorder %s45, %s46
    %p58 = scmp.eq.s32.totalorder %s15, 3
    %p59 = por %p57, %p58
    %p61 = scmp.ne.s32.totalorder %s46, %s60
    %p62 = scmp.eq.s32.totalorder %s15, 0
    %p63 = por %p61, %p62
    %s65 = sadd.s32 %s64, 1
    %p68 = scmp.eq.s32.totalorder %s9, 3
    %p69 = scmp.ne.s32.totalorder %s64, %s66
    %p70 = scmp.eq.s32.totalorder %s9, 0
    %p71 = por %p69, %p70
    %p72 = scmp.ne.s32.totalorder %s64, %s66
    %p73 = scmp.eq.s32.totalorder %s14, 3
    %p74 = por %p72, %p73
    %p75 = scmp.ne.s32.totalorder %s66, %s67
    %p76 = scmp.eq.s32.totalorder %s14, 0
    %p77 = por %p75, %p76
    %p78 = scmp.ne.s32.totalorder %s66, %s67
    %p79 = scmp.eq.s32.totalorder %s15, 3
    %p80 = por %p78, %p79
    %p82 = scmp.ne.s32.totalorder %s67, %s81
    %p83 = scmp.eq.s32.totalorder %s15, 0
    %p84 = por %p82, %p83
    %s85 = ssub.s32 %s9, %s16
    %p86 = scmp.eq.s32.totalorder %s85, 0
    %s88 = sadd.s32 %s87, 1
    %s89 = scalar_select %p86, %s87, %s88
    %p92 = pneg %p86
    %p93 = scmp.eq.s32.totalorder %s9, 3
    %p94 = por %p92, %p93
    %p95 = scmp.ne.s32.totalorder %s87, %s90
    %p96 = scmp.eq.s32.totalorder %s9, 0
    %p97 = por %p95, %p96
    %p98 = scmp.ne.s32.totalorder %s87, %s90
    %p99 = scmp.eq.s32.totalorder %s14, 3
    %p100 = por %p98, %p99
    %p101 = scmp.ne.s32.totalorder %s90, %s91
    %p102 = scmp.eq.s32.totalorder %s14, 0
    %p103 = por %p101, %p102
    %p104 = scmp.ne.s32.totalorder %s90, %s91
    %p105 = scmp.eq.s32.totalorder %s15, 3
    %p106 = por %p104, %p105
    %p108 = scmp.ne.s32.totalorder %s91, %s107
    %p109 = scmp.eq.s32.totalorder %s15, 0
    %p110 = por %p108, %p109
    %p111 = scmp.le.s32.totalorder 1, %s9
    %p112 = scmp.lt.s32.totalorder %s9, 5
    %p113 = pnand %p111, %p112
    %p114 = pneg %p113
    // Predicated region
    $region9: #{_lambda_.2} parent=5 // pred_check
      _
    $region10: #{_lambda_.2} parent=5 // pred_check_branch
      %116 = sbr.rel (%p113) target = $region12
    $region11: #{_lambda_.2} parent=5 // pred_region
      %s117 = ssub.s32 %s9, 1
      // Predicated region
      $region13: #{_lambda_.2} parent=11 // pred_check
        %p118 = pneg %p56
      $region14: #{_lambda_.2} parent=11 // pred_check_branch
        %120 = sbr.rel (%p118) target = $region16
      $region15: #{_lambda_.2} parent=11 // pred_region
        _
      $region16: #{_lambda_.2} parent=11 // pred_fallthru
        _
      // Predicated region
      $region17: #{_lambda_.2} parent=11 // pred_check
        %p121 = pneg %p77
      $region18: #{_lambda_.2} parent=11 // pred_check_branch
        %123 = sbr.rel (%p121) target = $region20
      $region19: #{_lambda_.2} parent=11 // pred_region
        _
      $region20: #{_lambda_.2} parent=11 // pred_fallthru
        _
    $region12: #{_lambda_.2} parent=5 // pred_fallthru
      _
    %p124 = scmp.lt.s32.totalorder %s9, 4
    // Predicated region
    $region21: #{_lambda_.2} parent=5 // pred_check
      %p125 = pneg %p124
    $region22: #{_lambda_.2} parent=5 // pred_check_branch
      %127 = sbr.rel (%p125) target = $region24
    $region23: #{_lambda_.2} parent=5 // pred_region
      // Predicated region
      $region25: #{_lambda_.2} parent=23 // pred_check
        %p128 = pneg %p29
      $region26: #{_lambda_.2} parent=23 // pred_check_branch
        %130 = sbr.rel (%p128) target = $region28
      $region27: #{_lambda_.2} parent=23 // pred_region
        %s131 = smul.u32 16, %s9
        %p132 = scmp.lt.s32.totalorder %s131, 63
        %s133 = scalar_select %p132, %s131, 63
        %s134 = smul.addr %s133, 2
        %s135 = smul.addr %s134, 4
        %s136 = scalar_lea.vmem %s0, %s135
        %s137 = smul.u32 16, %s9
      $region28: #{_lambda_.2} parent=23 // pred_fallthru
        _
    $region24: #{_lambda_.2} parent=5 // pred_fallthru
      _
    %p138 = scmp.le.s32.totalorder 1, %s9
    %p139 = scmp.lt.s32.totalorder %s9, 5
    %p140 = pnand %p138, %p139
    %p141 = pneg %p140
    // Predicated region
    $region29: #{_lambda_.2} parent=5 // pred_check
      _
    $region30: #{_lambda_.2} parent=5 // pred_check_branch
      %143 = sbr.rel (%p140) target = $region32
    $region31: #{_lambda_.2} parent=5 // pred_region
      %s144 = ssub.s32 %s9, 1
      %s145 = smul.u32 16, %s14
      %p146 = scmp.lt.s32.totalorder %s145, 63
      %s147 = scalar_select %p146, %s145, 63
      %s148 = smul.addr %s147, 2
      %s149 = smul.addr %s148, 4
      %s150 = scalar_lea.vmem %s0, %s149
      %p151 = pneg %p35
      %p152 = pneg %p32
      %p153 = pneg %p56
      %p154 = pneg %p53
      %p155 = pneg %p77
      %p156 = pneg %p74
      %p157 = pneg %p103
      %p158 = pneg %p100
      %s159 = smul.u32 16, %s14
      %p160 = scmp.lt.s32.totalorder %s159, 63
      %s161 = scalar_select %p160, %s159, 63
      %s162 = smul.addr %s161, 8
      %s163 = scalar_lea.vmem %s3, %s162
      %s164 = smul.u32 16, %s14
      %p165 = scmp.lt.s32.totalorder %s164, 63
      %s166 = scalar_select %p165, %s164, 63
      %s167 = smul.addr %s166, 2
      %s168 = smul.addr %s167, 4
      %s169 = scalar_lea.vmem %s0, %s168
      %s170 = smul.u32 16, %s14
      %s171 = smul.u32 16, %s14
      %p172 = scmp.lt.s32.totalorder %s171, 63
      %s173 = scalar_select %p172, %s171, 63
      %s174 = smul.addr %s173, 8
      %s175 = scalar_lea.vmem %s3, %s174
      %s176 = smul.u32 16, %s14
      %v178 = vld [vmem:[%s169] sm:$0xff]
      %v179 = vld [vmem:[%s169 + $0x8] sm:$0xff]
      %v180 = vld [vmem:[%s169 + $0x10] sm:$0xff]
      %v181 = vld [vmem:[%s169 + $0x18] sm:$0xff]
      %v182 = vld [vmem:[%s169 + $0x20] sm:$0xff]
      %v183 = vld [vmem:[%s169 + $0x28] sm:$0xff]
      %v184 = vld [vmem:[%s169 + $0x30] sm:$0xff]
      %v185 = vld [vmem:[%s169 + $0x38] sm:$0xff]
      %v186 = vld [vmem:[%s169 + $0x40] sm:$0xff]
      %v187 = vld [vmem:[%s169 + $0x48] sm:$0xff]
      %v188 = vld [vmem:[%s169 + $0x50] sm:$0xff]
      %v189 = vld [vmem:[%s169 + $0x58] sm:$0xff]
      %v190 = vld [vmem:[%s169 + $0x60] sm:$0xff]
      %v191 = vld [vmem:[%s169 + $0x68] sm:$0xff]
      %v192 = vld [vmem:[%s169 + $0x70] sm:$0xff]
      %v193 = vld [vmem:[%s169 + $0x78] sm:$0xff]
      %v194 = vld [vmem:[%s1] sm:$0xf]
      %v195 = vld [vmem:[%s1 + $0x4] sm:$0xf]
      %v196 = vld [vmem:[%s1 + $0x8] sm:$0xf]
      %v197 = vld [vmem:[%s1 + $0xc] sm:$0xf]
      %v198 = vld [vmem:[%s1 + $0x10] sm:$0xf]
      %v199 = vld [vmem:[%s1 + $0x14] sm:$0xf]
      %v200 = vld [vmem:[%s1 + $0x18] sm:$0xf]
      %v201 = vld [vmem:[%s1 + $0x1c] sm:$0xf]
      %v202 = vld [vmem:[%s1 + $0x20] sm:$0xf]
      %v203 = vld [vmem:[%s1 + $0x24] sm:$0xf]
      %v204 = vld [vmem:[%s1 + $0x28] sm:$0xf]
      %v205 = vld [vmem:[%s1 + $0x2c] sm:$0xf]
      %v206 = vld [vmem:[%s1 + $0x30] sm:$0xf]
      %v207 = vld [vmem:[%s1 + $0x34] sm:$0xf]
      %v208 = vld [vmem:[%s1 + $0x38] sm:$0xf]
      %v209 = vld [vmem:[%s1 + $0x3c] sm:$0xf]
      %v210 = vld [vmem:[%s1 + $0x40] sm:$0xf]
      %v211 = vld [vmem:[%s1 + $0x44] sm:$0xf]
      %v212 = vld [vmem:[%s1 + $0x48] sm:$0x3]
      %v213 = vld [vmem:[%s2] sm:$0x1]
      %v215 = vlaneseq
      %v216 = vshrl.u32 %v215, 7
      %v217 = vsub.s32 0, %v216
      %v218 = vrot.slane %v213, %v217
      %v236 = vunpack.c.l.b16 %v178
      %v237 = vunpack.c.h.b16 %v178
      %v238 = vunpack.c.l.b16 %v179
      %v239 = vunpack.c.h.b16 %v179
      %v240 = vunpack.c.l.b16 %v180
      %v241 = vunpack.c.h.b16 %v180
      %v242 = vunpack.c.l.b16 %v181
      %v243 = vunpack.c.h.b16 %v181
      %v244 = vunpack.c.l.b16 %v182
      %v245 = vunpack.c.h.b16 %v182
      %v246 = vunpack.c.l.b16 %v183
      %v247 = vunpack.c.h.b16 %v183
      %v248 = vunpack.c.l.b16 %v184
      %v249 = vunpack.c.h.b16 %v184
      %v250 = vunpack.c.l.b16 %v185
      %v251 = vunpack.c.h.b16 %v185
      %v252 = vunpack.c.l.b16 %v186
      %v253 = vunpack.c.h.b16 %v186
      %v254 = vunpack.c.l.b16 %v187
      %v255 = vunpack.c.h.b16 %v187
      %v256 = vunpack.c.l.b16 %v188
      %v257 = vunpack.c.h.b16 %v188
      %v258 = vunpack.c.l.b16 %v189
      %v259 = vunpack.c.h.b16 %v189
      %v260 = vunpack.c.l.b16 %v190
      %v261 = vunpack.c.h.b16 %v190
      %v262 = vunpack.c.l.b16 %v191
      %v263 = vunpack.c.h.b16 %v191
      %v264 = vunpack.c.l.b16 %v192
      %v265 = vunpack.c.h.b16 %v192
      %v266 = vunpack.c.l.b16 %v193
      %v267 = vunpack.c.h.b16 %v193
      %v268 = vpack.c.b16 %v238, %v236
      %v269 = vpack.c.b16 %v239, %v237
      %v270 = vpack.c.b16 %v242, %v240
      %v271 = vpack.c.b16 %v243, %v241
      %v272 = vpack.c.b16 %v246, %v244
      %v273 = vpack.c.b16 %v247, %v245
      %v274 = vpack.c.b16 %v250, %v248
      %v275 = vpack.c.b16 %v251, %v249
      %v276 = vpack.c.b16 %v254, %v252
      %v277 = vpack.c.b16 %v255, %v253
      %v278 = vpack.c.b16 %v258, %v256
      %v279 = vpack.c.b16 %v259, %v257
      %v280 = vpack.c.b16 %v262, %v260
      %v281 = vpack.c.b16 %v263, %v261
      %v282 = vpack.c.b16 %v266, %v264
      %v283 = vpack.c.b16 %v267, %v265
      %v311 = vunpack.c.l.b16 %v194
      %v312 = vunpack.c.l.b16 %v195
      %v313 = vunpack.c.l.b16 %v196
      %v314 = vunpack.c.l.b16 %v197
      %v315 = vunpack.c.l.b16 %v198
      %v316 = vunpack.c.l.b16 %v199
      %v317 = vunpack.c.l.b16 %v200
      %v318 = vunpack.c.l.b16 %v201
      %v319 = vunpack.c.l.b16 %v202
      %v320 = vunpack.c.l.b16 %v203
      %v321 = vunpack.c.l.b16 %v204
      %v322 = vunpack.c.l.b16 %v205
      %v323 = vunpack.c.l.b16 %v206
      %v324 = vunpack.c.l.b16 %v207
      %v325 = vunpack.c.l.b16 %v208
      %v326 = vunpack.c.l.b16 %v209
      %v327 = vunpack.c.l.b16 %v210
      %v328 = vunpack.c.l.b16 %v211
      %v329 = vunpack.c.l.b16 %v212
      %v330 = vpack.c.b16 %v312, %v311
      %v331 = vpack.c.b16 %v314, %v313
      %v332 = vpack.c.b16 %v316, %v315
      %v333 = vpack.c.b16 %v318, %v317
      %v334 = vpack.c.b16 %v320, %v319
      %v335 = vpack.c.b16 %v322, %v321
      %v336 = vpack.c.b16 %v324, %v323
      %v337 = vpack.c.b16 %v326, %v325
      %v338 = vpack.c.b16 %v328, %v327
      %v339 = vpack.c.b16 %v329, %v329
      %vm349 = vcmask 154624
      %v351 = vsel %vm349, %v269, 0
      %v354 = vsel %vm349, %v271, 0
      %v357 = vsel %vm349, %v273, 0
      %v360 = vsel %vm349, %v275, 0
      %v363 = vsel %vm349, %v277, 0
      %v366 = vsel %vm349, %v279, 0
      %v369 = vsel %vm349, %v281, 0
      %v372 = vsel %vm349, %v283, 0
      %vm374 = vcmask 1040384
      %vm375 = vcmask 1041408
      %v376 = vsel %vm374, 4294967295, 65535
      %v377 = vsel %vm375, %v376, 0
      %v379 = vand.u32 %v339, %v377
      %381 = vmatprep.subr.bf16.mxu0 0
      %382 = vmatpush1.bf16.msra.mxu0 %v330
      %383 = vmatprep.subr.bf16.mxu0 0
      %384 = vmatpush1.bf16.msra.mxu0 %v331
      %385 = vmatprep.subr.bf16.mxu0 0
      %386 = vmatpush1.bf16.msra.mxu0 %v332
      %387 = vmatprep.subr.bf16.mxu0 0
      %388 = vmatpush1.bf16.msra.mxu0 %v333
      %389 = vmatprep.subr.bf16.mxu0 0
      %390 = vmatpush1.bf16.msra.mxu0 %v334
      %391 = vmatprep.subr.bf16.mxu0 0
      %392 = vmatpush1.bf16.msra.mxu0 %v335
      %393 = vmatprep.subr.bf16.mxu0 0
      %394 = vmatpush1.bf16.msra.mxu0 %v336
      %395 = vmatprep.subr.bf16.mxu0 0
      %396 = vmatpush1.bf16.msra.mxu0 %v337
      %397 = vmatprep.subr.bf16.mxu0 0
      %398 = vmatpush1.bf16.msra.mxu0 %v338
      %399 = vmatprep.subr.bf16.mxu0 0
      %400 = vmatpush1.bf16.msra.mxu0 %v379
      %401 = vmatprep.subr.bf16.mxu0 0
      %402 = vmatpush1.bf16.msra.mxu0 0
      %403 = vmatprep.subr.bf16.mxu0 0
      %404 = vmatpush1.bf16.msra.mxu0 0
      %405 = vmatprep.subr.bf16.mxu0 0
      %406 = vmatpush1.bf16.msra.mxu0 0
      %407 = vmatprep.subr.bf16.mxu0 0
      %408 = vmatpush1.bf16.msra.mxu0 0
      %409 = vmatprep.subr.bf16.mxu0 0
      %410 = vmatpush1.bf16.msra.mxu0 0
      %411 = vmatprep.subr.bf16.mxu0 0
      %412 = vmatpush1.bf16.msra.mxu0 0
      %413 = vmatprep.mubr.bf16.mxu0 %v351
      %414 = vmatmul.mubr.bf16.gmra.mrb[0].mxu0 %v268
      %v415 = vpop.f32.mrb[0].mxu0
      %v416 = vadd.f32 %v218, %v415
      %v417 = vpop.f32.mrb[0].mxu0
      %v418 = vpop.f32.mrb[0].mxu0
      %v419 = vadd.f32 %v218, %v418
      %v420 = vpop.f32.mrb[0].mxu0
      %421 = vmatprep.mubr.bf16.mxu0 %v354
      %422 = vmatmul.mubr.bf16.gmra.mrb[0].mxu0 %v270
      %v423 = vpop.f32.mrb[0].mxu0
      %v424 = vadd.f32 %v218, %v423
      %v425 = vpop.f32.mrb[0].mxu0
      %v426 = vpop.f32.mrb[0].mxu0
      %v427 = vadd.f32 %v218, %v426
      %v428 = vpop.f32.mrb[0].mxu0
      %429 = vmatprep.mubr.bf16.mxu0 %v357
      %430 = vmatmul.mubr.bf16.gmra.mrb[0].mxu0 %v272
      %v431 = vpop.f32.mrb[0].mxu0
      %v432 = vadd.f32 %v218, %v431
      %v433 = vpop.f32.mrb[0].mxu0
      %v434 = vpop.f32.mrb[0].mxu0
      %v435 = vadd.f32 %v218, %v434
      %v436 = vpop.f32.mrb[0].mxu0
      %437 = vmatprep.mubr.bf16.mxu0 %v360
      %438 = vmatmul.mubr.bf16.gmra.mrb[0].mxu0 %v274
      %v439 = vpop.f32.mrb[0].mxu0
      %v440 = vadd.f32 %v218, %v439
      %v441 = vpop.f32.mrb[0].mxu0
      %v442 = vpop.f32.mrb[0].mxu0
      %v443 = vadd.f32 %v218, %v442
      %v444 = vpop.f32.mrb[0].mxu0
      %445 = vmatprep.mubr.bf16.mxu0 %v363
      %446 = vmatmul.mubr.bf16.gmra.mrb[0].mxu0 %v276
      %v447 = vpop.f32.mrb[0].mxu0
      %v448 = vadd.f32 %v218, %v447
      %v449 = vpop.f32.mrb[0].mxu0
      %v450 = vpop.f32.mrb[0].mxu0
      %v451 = vadd.f32 %v218, %v450
      %v452 = vpop.f32.mrb[0].mxu0
      %453 = vmatprep.mubr.bf16.mxu0 %v366
      %454 = vmatmul.mubr.bf16.gmra.mrb[0].mxu0 %v278
      %v455 = vpop.f32.mrb[0].mxu0
      %v456 = vadd.f32 %v218, %v455
      %v457 = vpop.f32.mrb[0].mxu0
      %v458 = vpop.f32.mrb[0].mxu0
      %v459 = vadd.f32 %v218, %v458
      %v460 = vpop.f32.mrb[0].mxu0
      %461 = vmatprep.mubr.bf16.mxu0 %v369
      %462 = vmatmul.mubr.bf16.gmra.mrb[0].mxu0 %v280
      %v463 = vpop.f32.mrb[0].mxu0
      %v464 = vadd.f32 %v218, %v463
      %v465 = vpop.f32.mrb[0].mxu0
      %v466 = vpop.f32.mrb[0].mxu0
      %v467 = vadd.f32 %v218, %v466
      %v468 = vpop.f32.mrb[0].mxu0
      %469 = vmatprep.mubr.bf16.mxu0 %v372
      %470 = vmatmul.mubr.bf16.gmra.mrb[0].mxu0 %v282
      %v471 = vpop.f32.mrb[0].mxu0
      %v472 = vadd.f32 %v218, %v471
      %v473 = vpop.f32.mrb[0].mxu0
      %v474 = vpop.f32.mrb[0].mxu0
      %v475 = vadd.f32 %v218, %v474
      %v476 = vpop.f32.mrb[0].mxu0
      %477 = vdwg.mxu0
      %v478 = vmax.f32 %v416, 0.0
      %v479 = vmax.f32 %v419, 0.0
      %v480 = vmax.f32 %v424, 0.0
      %v481 = vmax.f32 %v427, 0.0
      %v482 = vmax.f32 %v432, 0.0
      %v483 = vmax.f32 %v435, 0.0
      %v484 = vmax.f32 %v440, 0.0
      %v485 = vmax.f32 %v443, 0.0
      %v486 = vmax.f32 %v448, 0.0
      %v487 = vmax.f32 %v451, 0.0
      %v488 = vmax.f32 %v456, 0.0
      %v489 = vmax.f32 %v459, 0.0
      %v490 = vmax.f32 %v464, 0.0
      %v491 = vmax.f32 %v467, 0.0
      %v492 = vmax.f32 %v472, 0.0
      %v493 = vmax.f32 %v475, 0.0
      %vm494 = vcmask 523264
      %495 = vst.msk [vmem:[%s175] sm:$0xff] %vm494, %v478
      %496 = vst.msk [vmem:[%s175 + $0x8] sm:$0xff] %vm494, %v479
      %497 = vst.msk [vmem:[%s175 + $0x10] sm:$0xff] %vm494, %v480
      %498 = vst.msk [vmem:[%s175 + $0x18] sm:$0xff] %vm494, %v481
      %499 = vst.msk [vmem:[%s175 + $0x20] sm:$0xff] %vm494, %v482
      %500 = vst.msk [vmem:[%s175 + $0x28] sm:$0xff] %vm494, %v483
      %501 = vst.msk [vmem:[%s175 + $0x30] sm:$0xff] %vm494, %v484
      %502 = vst.msk [vmem:[%s175 + $0x38] sm:$0xff] %vm494, %v485
      %503 = vst.msk [vmem:[%s175 + $0x40] sm:$0xff] %vm494, %v486
      %504 = vst.msk [vmem:[%s175 + $0x48] sm:$0xff] %vm494, %v487
      %505 = vst.msk [vmem:[%s175 + $0x50] sm:$0xff] %vm494, %v488
      %506 = vst.msk [vmem:[%s175 + $0x58] sm:$0xff] %vm494, %v489
      %507 = vst.msk [vmem:[%s175 + $0x60] sm:$0xff] %vm494, %v490
      %508 = vst.msk [vmem:[%s175 + $0x68] sm:$0xff] %vm494, %v491
      %509 = vst.msk [vmem:[%s175 + $0x70] sm:$0xff] %vm494, %v492
      %510 = vst.msk [vmem:[%s175 + $0x78] sm:$0xff] %vm494, %v493
      %s511 = smul.u32 16, %s14
      %p512 = scmp.lt.s32.totalorder %s511, 63
      %s513 = scalar_select %p512, %s511, 63
      %s514 = smul.addr %s513, 8
      %s515 = scalar_lea.vmem %s3, %s514
      // Predicated region
      $region33: #{_lambda_.2} parent=31 // pred_check
        %p516 = pneg %p100
      $region34: #{_lambda_.2} parent=31 // pred_check_branch
        %518 = sbr.rel (%p516) target = $region36
      $region35: #{_lambda_.2} parent=31 // pred_region
        %s519 = smul.u32 16, %s14
      $region36: #{_lambda_.2} parent=31 // pred_fallthru
        _
    $region32: #{_lambda_.2} parent=5 // pred_fallthru
      _
    %p520 = scmp.le.s32.totalorder 2, %s9
    // Predicated region
    $region37: #{_lambda_.2} parent=5 // pred_check
      %p521 = pneg %p520
    $region38: #{_lambda_.2} parent=5 // pred_check_branch
      %523 = sbr.rel (%p521) target = $region40
    $region39: #{_lambda_.2} parent=5 // pred_region
      %s524 = ssub.s32 %s9, 2
      // Predicated region
      $region41: #{_lambda_.2} parent=39 // pred_check
        %p525 = pneg %p106
      $region42: #{_lambda_.2} parent=39 // pred_check_branch
        %527 = sbr.rel (%p525) target = $region44
      $region43: #{_lambda_.2} parent=39 // pred_region
        %s528 = smul.u32 16, %s15
        %p529 = scmp.lt.s32.totalorder %s528, 63
        %s530 = scalar_select %p529, %s528, 63
        %s531 = smul.addr %s530, 8
        %s532 = scalar_lea.vmem %s3, %s531
      $region44: #{_lambda_.2} parent=39 // pred_fallthru
        _
    $region40: #{_lambda_.2} parent=5 // pred_fallthru
      _
  $region6: #{_lambda_.2} parent=0 // loop_footer
    %s13 = sadd.s32 1, %s9
  $region7: #{_lambda_.2} parent=0 // loop_footer_branch
    %8 = sbr.rel target = $region3
  $region8: #{_lambda_.2} parent=0 // loop_exit
    _

// kernel: _lambda_.3
$region0: #{_lambda_.3}
  #allocation0 [shape = 'u32[]', space=smem, size = 0x4, offset = 0x4, fixed_abs, tag = 'smem constant byte address 0x4 - core index']
  #allocation1 [shape = 'u32[144,128]{1,0:T(1,128)}', space=vmem, size = 0x12000, scoped, tag = 'internal scratch']
  #allocation2 [shape = 'f32[17,8,64]{2,1,0:T(8,128)}', space=vmem, size = 0x11000, scoped, tag = 'scratch operand']
  %s0 = inlined_call_operand.vmem [shape: f32[2,18,9,64], index: 0, kind: input, shape index: {}]
  %s1 = inlined_call_operand.vmem [shape: f32[2,18,8,64], index: 1, kind: input, shape index: {}]
  %s2 = inlined_call_operand.hbm [shape: f32[2,8,8,64], index: 2, kind: output, shape index: {}]
  %s3 = sld [smem:[#allocation0]]
  $region41: #{_lambda_.3} parent=0
    _
  %s5 = ssub.s32 1, %s3
  %s6 = scalar_select 0, %s5, %s3
  $region1: #{_lambda_.3} parent=0
    #allocation3 [shape = 'u8[65536]{0}', space=vmem, size = 0x10000, scoped, tag = 'output window, operand 0']
    #allocation4 [shape = 's32[2]{0}', space=sflag, size = 0x8, scoped, tag = 'scoped memory for _lambda_.3']
    %7 = vsyncpa [#allocation4], 0
    %s8 = scalar_lea.sflag [#allocation4], 1
    %9 = vsyncpa %s8, 0
    loop: start=0, step=1, limit=4
    $region2: #{_lambda_.3} parent=1 // loop_pre_header
      _
    $region3: #{_lambda_.3} parent=1 // loop_header
      %s11 = sphi 0, %s15
      %p12 = scmp.ge.s32.totalorder %s11, 4
      %s21 = sphi 0, %s23
      %s24 = sphi 0, %s21
      %s25 = sphi 0, %s24
      %s41 = sphi 0, %s25
      %s47 = sphi 0, %s49
      %s50 = sphi 0, %s47
      %s51 = sphi 0, %s50
      %s67 = sphi 0, %s51
      %s73 = sphi 0, %s75
      %s76 = sphi 0, %s73
      %s77 = sphi 0, %s76
      %s93 = sphi 0, %s77
    $region4: #{_lambda_.3} parent=1 // loop_header_branch
      %14 = sbr.rel (%p12) target = $region8
    $region5: #{_lambda_.3} parent=1 // loop_body
      %s16 = ssub.s32 %s11, 1
      %s17 = ssub.s32 %s11, 2
      %s18 = sadd.s32 %s11, 1
      %s19 = ssub.s32 %s11, %s18
      %p20 = scmp.eq.s32.totalorder %s19, 0
      %s22 = sadd.s32 %s21, 1
      %s23 = scalar_select %p20, %s21, %s22
      %p26 = pneg %p20
      %p27 = scmp.eq.s32.totalorder %s11, 1
      %p28 = por %p26, %p27
      %p29 = scmp.ne.s32.totalorder %s21, %s24
      %p30 = scmp.eq.s32.totalorder %s11, 0
      %p31 = por %p29, %p30
      %p32 = scmp.ne.s32.totalorder %s21, %s24
      %p33 = scmp.eq.s32.totalorder %s16, 1
      %p34 = por %p32, %p33
      %p35 = scmp.ne.s32.totalorder %s24, %s25
      %p36 = scmp.eq.s32.totalorder %s16, 0
      %p37 = por %p35, %p36
      %p38 = scmp.ne.s32.totalorder %s24, %s25
      %p39 = scmp.eq.s32.totalorder %s17, 1
      %p40 = por %p38, %p39
      %p42 = scmp.ne.s32.totalorder %s25, %s41
      %p43 = scmp.eq.s32.totalorder %s17, 0
      %p44 = por %p42, %p43
      %s45 = ssub.s32 %s11, %s18
      %p46 = scmp.eq.s32.totalorder %s45, 0
      %s48 = sadd.s32 %s47, 1
      %s49 = scalar_select %p46, %s47, %s48
      %p52 = pneg %p46
      %p53 = scmp.eq.s32.totalorder %s11, 1
      %p54 = por %p52, %p53
      %p55 = scmp.ne.s32.totalorder %s47, %s50
      %p56 = scmp.eq.s32.totalorder %s11, 0
      %p57 = por %p55, %p56
      %p58 = scmp.ne.s32.totalorder %s47, %s50
      %p59 = scmp.eq.s32.totalorder %s16, 1
      %p60 = por %p58, %p59
      %p61 = scmp.ne.s32.totalorder %s50, %s51
      %p62 = scmp.eq.s32.totalorder %s16, 0
      %p63 = por %p61, %p62
      %p64 = scmp.ne.s32.totalorder %s50, %s51
      %p65 = scmp.eq.s32.totalorder %s17, 1
      %p66 = por %p64, %p65
      %p68 = scmp.ne.s32.totalorder %s51, %s67
      %p69 = scmp.eq.s32.totalorder %s17, 0
      %p70 = por %p68, %p69
      %s71 = ssub.s32 %s11, %s18
      %p72 = scmp.eq.s32.totalorder %s71, 0
      %s74 = sadd.s32 %s73, 1
      %s75 = scalar_select %p72, %s73, %s74
      %p78 = pneg %p72
      %p79 = scmp.eq.s32.totalorder %s11, 1
      %p80 = por %p78, %p79
      %p81 = scmp.ne.s32.totalorder %s73, %s76
      %p82 = scmp.eq.s32.totalorder %s11, 0
      %p83 = por %p81, %p82
      %p84 = scmp.ne.s32.totalorder %s73, %s76
      %p85 = scmp.eq.s32.totalorder %s16, 1
      %p86 = por %p84, %p85
      %p87 = scmp.ne.s32.totalorder %s76, %s77
      %p88 = scmp.eq.s32.totalorder %s16, 0
      %p89 = por %p87, %p88
      %p90 = scmp.ne.s32.totalorder %s76, %s77
      %p91 = scmp.eq.s32.totalorder %s17, 1
      %p92 = por %p90, %p91
      %p94 = scmp.ne.s32.totalorder %s77, %s93
      %p95 = scmp.eq.s32.totalorder %s17, 0
      %p96 = por %p94, %p95
      %p97 = scmp.le.s32.totalorder 1, %s11
      %p98 = scmp.lt.s32.totalorder %s11, 3
      %p99 = pnand %p97, %p98
      %p100 = pneg %p99
      // Predicated region
      $region9: #{_lambda_.3} parent=5 // pred_check
        _
      $region10: #{_lambda_.3} parent=5 // pred_check_branch
        %102 = sbr.rel (%p99) target = $region12
      $region11: #{_lambda_.3} parent=5 // pred_region
        %s103 = ssub.s32 %s11, 1
      $region12: #{_lambda_.3} parent=5 // pred_fallthru
        _
      %p104 = scmp.lt.s32.totalorder %s11, 2
      // Predicated region
      $region13: #{_lambda_.3} parent=5 // pred_check
        %p105 = pneg %p104
      $region14: #{_lambda_.3} parent=5 // pred_check_branch
        %107 = sbr.rel (%p105) target = $region16
      $region15: #{_lambda_.3} parent=5 // pred_region
        // Predicated region
        $region17: #{_lambda_.3} parent=15 // pred_check
          %p108 = pneg %p31
        $region18: #{_lambda_.3} parent=15 // pred_check_branch
          %110 = sbr.rel (%p108) target = $region20
        $region19: #{_lambda_.3} parent=15 // pred_region
          %p111 = scmp.lt.s32.totalorder %s11, 1
          %s112 = scalar_select %p111, %s11, 1
          %s113 = smul.addr %s112, 36
          %s114 = smul.addr %s113, 8
          %s115 = scalar_lea.vmem %s0, %s114
        $region20: #{_lambda_.3} parent=15 // pred_fallthru
          _
        // Predicated region
        $region21: #{_lambda_.3} parent=15 // pred_check
          %p116 = pneg %p57
        $region22: #{_lambda_.3} parent=15 // pred_check_branch
          %118 = sbr.rel (%p116) target = $region24
        $region23: #{_lambda_.3} parent=15 // pred_region
          %p119 = scmp.lt.s32.totalorder %s11, 1
          %s120 = scalar_select %p119, %s11, 1
          %s121 = smul.addr %s120, 18
          %s122 = smul.addr %s121, 8
          %s123 = scalar_lea.vmem %s1, %s122
        $region24: #{_lambda_.3} parent=15 // pred_fallthru
          _
      $region16: #{_lambda_.3} parent=5 // pred_fallthru
        _
      %p124 = scmp.le.s32.totalorder 1, %s11
      %p125 = scmp.lt.s32.totalorder %s11, 3
      %p126 = pnand %p124, %p125
      %p127 = pneg %p126
      // Predicated region
      $region25: #{_lambda_.3} parent=5 // pred_check
        _
      $region26: #{_lambda_.3} parent=5 // pred_check_branch
        %129 = sbr.rel (%p126) target = $region28
      $region27: #{_lambda_.3} parent=5 // pred_region
        %s130 = ssub.s32 %s11, 1
        %p131 = scmp.lt.s32.totalorder %s16, 1
        %s132 = scalar_select %p131, %s16, 1
        %s133 = smul.addr %s132, 36
        %s134 = smul.addr %s133, 8
        %s135 = scalar_lea.vmem %s0, %s134
        %p136 = pneg %p37
        %p137 = pneg %p34
        %p138 = scmp.lt.s32.totalorder %s16, 1
        %s139 = scalar_select %p138, %s16, 1
        %s140 = smul.addr %s139, 18
        %s141 = smul.addr %s140, 8
        %s142 = scalar_lea.vmem %s1, %s141
        %p143 = pneg %p63
        %p144 = pneg %p60
        %p145 = pneg %p89
        %p146 = pneg %p86
        %s147 = sand.u32 %s76, 1
        %s148 = scalar_lea.sflag [#allocation4], %s147
        %s149 = sand.u32 %s76, 1
        %s150 = smul.addr %s149, 64
        %s151 = scalar_lea.vmem [#allocation3], %s150
        %p152 = scmp.lt.s32.totalorder %s16, 1
        %s153 = scalar_select %p152, %s16, 1
        %s154 = smul.addr %s153, 36
        %s155 = smul.addr %s154, 8
        %s156 = scalar_lea.vmem %s0, %s155
        %p157 = scmp.lt.s32.totalorder %s16, 1
        %s158 = scalar_select %p157, %s16, 1
        %s159 = smul.addr %s158, 18
        %s160 = smul.addr %s159, 8
        %s161 = scalar_lea.vmem %s1, %s160
        %v162 = vld [vmem:[%s156] sm:$0xff]
        %v163 = vld [vmem:[%s156 + $0x1] sm:$0xff]
        %v164 = vld [vmem:[%s161] sm:$0xff]
        %v165 = vmax.f32 %v162, %v163
        %v166 = vmax.f32 %v165, %v164
        %vm167 = vcmask 523264
        %168 = vst.msk [vmem:[#allocation2] sm:$0xff] %vm167, %v166
        %s169 = scalar_lea.vmem %s156, 16
        %v170 = vld [vmem:[%s169] sm:$0xff]
        %v171 = vld [vmem:[%s169 + $0x1] sm:$0xff]
        %s172 = scalar_lea.vmem %s161, 8
        %v173 = vld [vmem:[%s172] sm:$0xff]
        %v174 = vmax.f32 %v170, %v171
        %v175 = vmax.f32 %v174, %v173
        %s176 = scalar_lea.vmem [#allocation2], 8
        %177 = vst.msk [vmem:[%s176] sm:$0xff] %vm167, %v175
        %s178 = scalar_lea.vmem %s156, 32
        %v179 = vld [vmem:[%s178] sm:$0xff]
        %v180 = vld [vmem:[%s178 + $0x1] sm:$0xff]
        %s181 = scalar_lea.vmem %s161, 16
        %v182 = vld [vmem:[%s181] sm:$0xff]
        %v183 = vmax.f32 %v179, %v180
        %v184 = vmax.f32 %v183, %v182
        %s185 = scalar_lea.vmem [#allocation2], 16
        %186 = vst.msk [vmem:[%s185] sm:$0xff] %vm167, %v184
        %s187 = scalar_lea.vmem %s156, 48
        %v188 = vld [vmem:[%s187] sm:$0xff]
        %v189 = vld [vmem:[%s187 + $0x1] sm:$0xff]
        %s190 = scalar_lea.vmem %s161, 24
        %v191 = vld [vmem:[%s190] sm:$0xff]
        %v192 = vmax.f32 %v188, %v189
        %v193 = vmax.f32 %v192, %v191
        %s194 = scalar_lea.vmem [#allocation2], 24
        %195 = vst.msk [vmem:[%s194] sm:$0xff] %vm167, %v193
        %s196 = scalar_lea.vmem %s156, 64
        %v197 = vld [vmem:[%s196] sm:$0xff]
        %v198 = vld [vmem:[%s196 + $0x1] sm:$0xff]
        %s199 = scalar_lea.vmem %s161, 32
        %v200 = vld [vmem:[%s199] sm:$0xff]
        %v201 = vmax.f32 %v197, %v198
        %v202 = vmax.f32 %v201, %v200
        %s203 = scalar_lea.vmem [#allocation2], 32
        %204 = vst.msk [vmem:[%s203] sm:$0xff] %vm167, %v202
        %s205 = scalar_lea.vmem %s156, 80
        %v206 = vld [vmem:[%s205] sm:$0xff]
        %v207 = vld [vmem:[%s205 + $0x1] sm:$0xff]
        %s208 = scalar_lea.vmem %s161, 40
        %v209 = vld [vmem:[%s208] sm:$0xff]
        %v210 = vmax.f32 %v206, %v207
        %v211 = vmax.f32 %v210, %v209
        %s212 = scalar_lea.vmem [#allocation2], 40
        %213 = vst.msk [vmem:[%s212] sm:$0xff] %vm167, %v211
        %s214 = scalar_lea.vmem %s156, 96
        %v215 = vld [vmem:[%s214] sm:$0xff]
        %v216 = vld [vmem:[%s214 + $0x1] sm:$0xff]
        %s217 = scalar_lea.vmem %s161, 48
        %v218 = vld [vmem:[%s217] sm:$0xff]
        %v219 = vmax.f32 %v215, %v216
        %v220 = vmax.f32 %v219, %v218
        %s221 = scalar_lea.vmem [#allocation2], 48
        %222 = vst.msk [vmem:[%s221] sm:$0xff] %vm167, %v220
        %s223 = scalar_lea.vmem %s156, 112
        %v224 = vld [vmem:[%s223] sm:$0xff]
        %v225 = vld [vmem:[%s223 + $0x1] sm:$0xff]
        %s226 = scalar_lea.vmem %s161, 56
        %v227 = vld [vmem:[%s226] sm:$0xff]
        %v228 = vmax.f32 %v224, %v225
        %v229 = vmax.f32 %v228, %v227
        %s230 = scalar_lea.vmem [#allocation2], 56
        %231 = vst.msk [vmem:[%s230] sm:$0xff] %vm167, %v229
        %s232 = scalar_lea.vmem %s156, 128
        %v233 = vld [vmem:[%s232] sm:$0xff]
        %v234 = vld [vmem:[%s232 + $0x1] sm:$0xff]
        %s235 = scalar_lea.vmem %s161, 64
        %v236 = vld [vmem:[%s235] sm:$0xff]
        %v237 = vmax.f32 %v233, %v234
        %v238 = vmax.f32 %v237, %v236
        %s239 = scalar_lea.vmem [#allocation2], 64
        %240 = vst.msk [vmem:[%s239] sm:$0xff] %vm167, %v238
        %s241 = scalar_lea.vmem %s156, 144
        %v242 = vld [vmem:[%s241] sm:$0xff]
        %v243 = vld [vmem:[%s241 + $0x1] sm:$0xff]
        %s244 = scalar_lea.vmem %s161, 72
        %v245 = vld [vmem:[%s244] sm:$0xff]
        %v246 = vmax.f32 %v242, %v243
        %v247 = vmax.f32 %v246, %v245
        %s248 = scalar_lea.vmem [#allocation2], 72
        %249 = vst.msk [vmem:[%s248] sm:$0xff] %vm167, %v247
        %s250 = scalar_lea.vmem %s156, 160
        %v251 = vld [vmem:[%s250] sm:$0xff]
        %v252 = vld [vmem:[%s250 + $0x1] sm:$0xff]
        %s253 = scalar_lea.vmem %s161, 80
        %v254 = vld [vmem:[%s253] sm:$0xff]
        %v255 = vmax.f32 %v251, %v252
        %v256 = vmax.f32 %v255, %v254
        %s257 = scalar_lea.vmem [#allocation2], 80
        %258 = vst.msk [vmem:[%s257] sm:$0xff] %vm167, %v256
        %s259 = scalar_lea.vmem %s156, 176
        %v260 = vld [vmem:[%s259] sm:$0xff]
        %v261 = vld [vmem:[%s259 + $0x1] sm:$0xff]
        %s262 = scalar_lea.vmem %s161, 88
        %v263 = vld [vmem:[%s262] sm:$0xff]
        %v264 = vmax.f32 %v260, %v261
        %v265 = vmax.f32 %v264, %v263
        %s266 = scalar_lea.vmem [#allocation2], 88
        %267 = vst.msk [vmem:[%s266] sm:$0xff] %vm167, %v265
        %s268 = scalar_lea.vmem %s156, 192
        %v269 = vld [vmem:[%s268] sm:$0xff]
        %v270 = vld [vmem:[%s268 + $0x1] sm:$0xff]
        %s271 = scalar_lea.vmem %s161, 96
        %v272 = vld [vmem:[%s271] sm:$0xff]
        %v273 = vmax.f32 %v269, %v270
        %v274 = vmax.f32 %v273, %v272
        %s275 = scalar_lea.vmem [#allocation2], 96
        %276 = vst.msk [vmem:[%s275] sm:$0xff] %vm167, %v274
        %s277 = scalar_lea.vmem %s156, 208
        %v278 = vld [vmem:[%s277] sm:$0xff]
        %v279 = vld [vmem:[%s277 + $0x1] sm:$0xff]
        %s280 = scalar_lea.vmem %s161, 104
        %v281 = vld [vmem:[%s280] sm:$0xff]
        %v282 = vmax.f32 %v278, %v279
        %v283 = vmax.f32 %v282, %v281
        %s284 = scalar_lea.vmem [#allocation2], 104
        %285 = vst.msk [vmem:[%s284] sm:$0xff] %vm167, %v283
        %s286 = scalar_lea.vmem %s156, 224
        %v287 = vld [vmem:[%s286] sm:$0xff]
        %v288 = vld [vmem:[%s286 + $0x1] sm:$0xff]
        %s289 = scalar_lea.vmem %s161, 112
        %v290 = vld [vmem:[%s289] sm:$0xff]
        %v291 = vmax.f32 %v287, %v288
        %v292 = vmax.f32 %v291, %v290
        %s293 = scalar_lea.vmem [#allocation2], 112
        %294 = vst.msk [vmem:[%s293] sm:$0xff] %vm167, %v292
        %s295 = scalar_lea.vmem %s156, 240
        %v296 = vld [vmem:[%s295] sm:$0xff]
        %v297 = vld [vmem:[%s295 + $0x1] sm:$0xff]
        %s298 = scalar_lea.vmem %s161, 120
        %v299 = vld [vmem:[%s298] sm:$0xff]
        %v300 = vmax.f32 %v296, %v297
        %v301 = vmax.f32 %v300, %v299
        %s302 = scalar_lea.vmem [#allocation2], 120
        %303 = vst.msk [vmem:[%s302] sm:$0xff] %vm167, %v301
        %s304 = scalar_lea.vmem %s156, 256
        %v305 = vld [vmem:[%s304] sm:$0xff]
        %v306 = vld [vmem:[%s304 + $0x1] sm:$0xff]
        %s307 = scalar_lea.vmem %s161, 128
        %v308 = vld [vmem:[%s307] sm:$0xff]
        %v309 = vmax.f32 %v305, %v306
        %v310 = vmax.f32 %v309, %v308
        %s311 = scalar_lea.vmem [#allocation2], 128
        %312 = vst.msk [vmem:[%s311] sm:$0xff] %vm167, %v310
        %v313 = vld [vmem:[#allocation2] sm:$0xff]
        %v314 = vld [vmem:[%s176] sm:$0xff]
        %v315 = vmax.f32 %v313, %v314
        %v316 = vld [vmem:[%s185] sm:$0xff]
        %v317 = vmax.f32 %v315, %v316
        %318 = vst.msk [vmem:[%s151] sm:$0xff] %vm167, %v317
        %v319 = vld [vmem:[%s185] sm:$0xff]
        %v320 = vld [vmem:[%s194] sm:$0xff]
        %v321 = vmax.f32 %v319, %v320
        %v322 = vld [vmem:[%s203] sm:$0xff]
        %v323 = vmax.f32 %v321, %v322
        %s324 = scalar_lea.vmem %s151, 8 [#allocation3]
        %325 = vst.msk [vmem:[%s324] sm:$0xff] %vm167, %v323
        %v326 = vld [vmem:[%s203] sm:$0xff]
        %v327 = vld [vmem:[%s212] sm:$0xff]
        %v328 = vmax.f32 %v326, %v327
        %v329 = vld [vmem:[%s221] sm:$0xff]
        %v330 = vmax.f32 %v328, %v329
        %s331 = scalar_lea.vmem %s151, 16 [#allocation3]
        %332 = vst.msk [vmem:[%s331] sm:$0xff] %vm167, %v330
        %v333 = vld [vmem:[%s221] sm:$0xff]
        %v334 = vld [vmem:[%s230] sm:$0xff]
        %v335 = vmax.f32 %v333, %v334
        %v336 = vld [vmem:[%s239] sm:$0xff]
        %v337 = vmax.f32 %v335, %v336
        %s338 = scalar_lea.vmem %s151, 24 [#allocation3]
        %339 = vst.msk [vmem:[%s338] sm:$0xff] %vm167, %v337
        %v340 = vld [vmem:[%s239] sm:$0xff]
        %v341 = vld [vmem:[%s248] sm:$0xff]
        %v342 = vmax.f32 %v340, %v341
        %v343 = vld [vmem:[%s257] sm:$0xff]
        %v344 = vmax.f32 %v342, %v343
        %s345 = scalar_lea.vmem %s151, 32 [#allocation3]
        %346 = vst.msk [vmem:[%s345] sm:$0xff] %vm167, %v344
        %v347 = vld [vmem:[%s257] sm:$0xff]
        %v348 = vld [vmem:[%s266] sm:$0xff]
        %v349 = vmax.f32 %v347, %v348
        %v350 = vld [vmem:[%s275] sm:$0xff]
        %v351 = vmax.f32 %v349, %v350
        %s352 = scalar_lea.vmem %s151, 40 [#allocation3]
        %353 = vst.msk [vmem:[%s352] sm:$0xff] %vm167, %v351
        %v354 = vld [vmem:[%s275] sm:$0xff]
        %v355 = vld [vmem:[%s284] sm:$0xff]
        %v356 = vmax.f32 %v354, %v355
        %v357 = vld [vmem:[%s293] sm:$0xff]
        %v358 = vmax.f32 %v356, %v357
        %s359 = scalar_lea.vmem %s151, 48 [#allocation3]
        %360 = vst.msk [vmem:[%s359] sm:$0xff] %vm167, %v358
        %v361 = vld [vmem:[%s293] sm:$0xff]
        %v362 = vld [vmem:[%s302] sm:$0xff]
        %v363 = vmax.f32 %v361, %v362
        %v364 = vld [vmem:[%s311] sm:$0xff]
        %v365 = vmax.f32 %v363, %v364
        %s366 = scalar_lea.vmem %s151, 56 [#allocation3]
        %367 = vst.msk [vmem:[%s366] sm:$0xff] %vm167, %v365
        %s368 = sand.u32 %s76, 1
        %s369 = scalar_lea.sflag [#allocation4], %s368
        %s370 = sand.u32 %s76, 1
        %s371 = smul.addr %s370, 64
        %s372 = scalar_lea.vmem [#allocation3], %s371
        // Predicated region
        $region29: #{_lambda_.3} parent=27 // pred_check
          %p373 = pneg %p86
        $region30: #{_lambda_.3} parent=27 // pred_check_branch
          %375 = sbr.rel (%p373) target = $region32
        $region31: #{_lambda_.3} parent=27 // pred_region
          %s377 = ssub.s32 1024, 1024
          %378 = vsyncadd %s369, %s377
          %s379 = smul.addr %s16, 8
          %s380 = smul.addr %s379, 128
          %s381 = scalar_lea.hbm %s2, %s380
          %s382 = sshll.u32 %s372, 4
          %s383 = int_to_ptr.vmem [resolvable:$true] %s382
          %388 = dma.vmem_to_hbm [thread:$0]  %s383, 1024, %s381, %s369, 128, 128, 8
        $region32: #{_lambda_.3} parent=27 // pred_fallthru
          _
      $region28: #{_lambda_.3} parent=5 // pred_fallthru
        _
      %p389 = scmp.le.s32.totalorder 2, %s11
      // Predicated region
      $region33: #{_lambda_.3} parent=5 // pred_check
        %p390 = pneg %p389
      $region34: #{_lambda_.3} parent=5 // pred_check_branch
        %392 = sbr.rel (%p390) target = $region36
      $region35: #{_lambda_.3} parent=5 // pred_region
        %s393 = ssub.s32 %s11, 2
        // Predicated region
        $region37: #{_lambda_.3} parent=35 // pred_check
          %p394 = pneg %p92
        $region38: #{_lambda_.3} parent=35 // pred_check_branch
          %396 = sbr.rel (%p394) target = $region40
        $region39: #{_lambda_.3} parent=35 // pred_region
          %s397 = sand.u32 %s77, 1
          %s398 = scalar_lea.sflag [#allocation4], %s397
          %s399 = sand.u32 %s77, 1
          %s400 = smul.addr %s399, 64
          %s401 = scalar_lea.vmem [#allocation3], %s400
          %402 = dma.done %s398, 1024
        $region40: #{_lambda_.3} parent=35 // pred_fallthru
          _
      $region36: #{_lambda_.3} parent=5 // pred_fallthru
        _
    $region6: #{_lambda_.3} parent=1 // loop_footer
      %s15 = sadd.s32 1, %s11
    $region7: #{_lambda_.3} parent=1 // loop_footer_branch
      %10 = sbr.rel target = $region3
    $region8: #{_lambda_.3} parent=1 // loop_exit
      _
    %403 = vsyncpa [#allocation4], 1
    %s404 = scalar_lea.sflag [#allocation4], 1
    %405 = vsyncpa %s404, 1

</llo_original>
